<compile_context>
chip_gen: v7x
topology: tpu7x:2x2x1
jax: 0.10.0
libtpu: 0.0.40
codegen_flags: <defaults>
</compile_context>

<pallas_src>
import jax
import jax.numpy as jnp
from jax.experimental import pallas as pl
from jax.experimental.pallas import tpu as pltpu

HIDDEN = 512
OUT_LANES = 128   # lane-dense output slab width (unmasked vst; col 0 is the result)
MAX_TB = 256      # fills the 256-wide MXU rows on v6e/v7x; amortizes step overhead


def _round_up(x, m):
    return ((x + m - 1) // m) * m


def _pick_tb(b):
    """Batch tile: full-extent for tiny batches, >=2 tiles for v7x megacore."""
    if b <= 32:
        return b                              # one full-extent tile, no padding/masking
    if b <= 2 * MAX_TB:
        return _round_up(pl.cdiv(b, 2), 8)    # >=2 independent tiles (v7x: 2 TCs)
    return MAX_TB


def fasnet_kernel(x_ref, wbb_ref, bbb_ref, wfc_ref, bfc_ref, out_ref):
    # x_ref   : (TB, D_in)        bf16  flattened image tile
    # wbb_ref : (D_in, HIDDEN)    bf16  synthetic backbone weight (VMEM-resident)
    # bbb_ref : (1, HIDDEN)       f32   synthetic backbone bias
    # wfc_ref : (HIDDEN, OUT_LANES) bf16  head weight column replicated across lanes
    # bfc_ref : (1, 1)            f32   head bias, SMEM scalar
    # out_ref : (TB, OUT_LANES)   bf16  sigmoid prob replicated along lanes

    # --- synthetic backbone: Linear + ReLU (bf16 MXU matmul, f32 accumulation) ---
    h = jnp.dot(x_ref[...], wbb_ref[...], preferred_element_type=jnp.float32)
    h = jnp.maximum(h + bbb_ref[...], 0.0)              # f32 epilogue (VPU)

    # --- head: nn.Linear(512, 1) as a second MXU matmul against the
    #     lane-replicated weight -> lane-dense (TB, 128) logits directly ---
    logits = jnp.dot(h.astype(jnp.bfloat16), wfc_ref[...],
                     preferred_element_type=jnp.float32) + bfc_ref[0, 0]

    # sigmoid on EUP; bf16 store halves HBM writeback (wrapper slices col 0)
    out_ref[...] = jax.nn.sigmoid(logits).astype(out_ref.dtype)


def fasnet_forward(x_nchw, w_bb, b_bb, w_fc, b_fc):
    """x_nchw: (B, C, H, W) image batch (PyTorch NCHW convention).

    w_bb : (d_in, HIDDEN) synthetic backbone weight
    b_bb : (1, HIDDEN)    synthetic backbone bias
    w_fc : (1, HIDDEN)    head weight (PyTorch nn.Linear(512, 1).weight layout)
    b_fc : (1, 1)         head bias
    """
    B = x_nchw.shape[0]
    d_in = x_nchw.shape[1] * x_nchw.shape[2] * x_nchw.shape[3]
    hidden = w_bb.shape[1]

    # flatten exactly like torch.flatten(x, 1); single cast straight to bf16
    x_bf = x_nchw.reshape(B, d_in).astype(jnp.bfloat16)
    w_bf = w_bb.astype(jnp.bfloat16)

    # head weight as a (HIDDEN, OUT_LANES) bf16 matrix: the single output column
    # replicated across 128 lanes so the head runs on the MXU and the output
    # store is an unmasked lane-dense slab.
    wfc_rep = jnp.broadcast_to(
        w_fc.reshape(hidden, 1), (hidden, OUT_LANES)).astype(jnp.bfloat16)

    tb = _pick_tb(B)
    n_tiles = pl.cdiv(B, tb)

    out_slab = pl.pallas_call(
        fasnet_kernel,
        out_shape=jax.ShapeDtypeStruct((B, OUT_LANES), jnp.bfloat16),
        grid=(n_tiles,),
        in_specs=[
            pl.BlockSpec((tb, d_in), lambda i: (i, 0)),            # batch-tiled x
            pl.BlockSpec((d_in, hidden), lambda i: (0, 0)),        # backbone W, resident
            pl.BlockSpec((1, hidden), lambda i: (0, 0)),           # backbone bias
            pl.BlockSpec((hidden, OUT_LANES), lambda i: (0, 0)),   # head W, lane-replicated
            pl.BlockSpec(memory_space=pltpu.MemorySpace.SMEM),     # head bias scalar
        ],
        out_specs=pl.BlockSpec((tb, OUT_LANES), lambda i: (i, 0)),
        compiler_params=pltpu.CompilerParams(
            # batch tiles are independent -> v7x can shard them across 2 TCs
            dimension_semantics=("parallel",),
        ),
    )(x_bf, w_bf, b_bb, wfc_rep, b_fc)

    return out_slab[:, :1].astype(jnp.float32)


def init_params(key, d_in, hidden=HIDDEN):
    """Deterministic synthetic parameters (shapes implied by the module)."""
    k1, k2, k3, k4 = jax.random.split(key, 4)
    # synthetic backbone linear
    w_bb = jax.random.normal(k1, (d_in, hidden), dtype=jnp.float32) * (1.0 / jnp.sqrt(d_in))
    b_bb = jax.random.normal(k2, (1, hidden), dtype=jnp.float32) * 0.01
    # head: nn.Linear(512, 1), weight stored in PyTorch (out, in) = (1, 512) layout
    w_fc = jax.random.normal(k3, (1, hidden), dtype=jnp.float32) * (1.0 / jnp.sqrt(hidden))
    b_fc = jax.random.normal(k4, (1, 1), dtype=jnp.float32) * 0.01
    return w_bb, b_bb, w_fc, b_fc


if __name__ == "__main__":
    key = jax.random.PRNGKey(0)
    k_x, k_p = jax.random.split(key)

    # small shapes consistent with an image-classification forward pass
    B, C, H, W = 2, 3, 16, 16
    x = jax.random.normal(k_x, (B, C, H, W), dtype=jnp.float32)

    d_in = C * H * W  # 768
    w_bb, b_bb, w_fc, b_fc = init_params(k_p, d_in, hidden=HIDDEN)

    out = fasnet_forward(x, w_bb, b_bb, w_fc, b_fc)
    out = jax.block_until_ready(out)

    # reference check in plain JAX using the identical bf16-in / f32-accumulate
    # recipe (self-validates the kernel; bf16-vs-f32 model delta is documented
    # above, not asserted here).
    x_flat = x.reshape(B, d_in)
    h_ref = jnp.dot(x_flat.astype(jnp.bfloat16), w_bb.astype(jnp.bfloat16),
                    preferred_element_type=jnp.float32)
    h_ref = jnp.maximum(h_ref + b_bb, 0.0)
    logits_ref = jnp.dot(h_ref.astype(jnp.bfloat16),
                         w_fc.reshape(d_in and HIDDEN, 1).astype(jnp.bfloat16),
                         preferred_element_type=jnp.float32) + b_fc[0, 0]
    ref = jax.nn.sigmoid(logits_ref).astype(jnp.bfloat16).astype(jnp.float32)

    assert out.shape == (B, 1), out.shape
    assert jnp.allclose(out, ref, atol=5e-3, rtol=5e-3), (out, ref)

    print("KERNEL_OK")
</pallas_src>

<mosaic_0001>
module attributes {stable_mosaic.version = 11 : i64} {
  func.func @fasnet_kernel(%arg0: i32, %arg1: memref<2x768xbf16, #tpu.memory_space<vmem>>, %arg2: memref<768x512xbf16, #tpu.memory_space<vmem>>, %arg3: memref<1x512xf32, #tpu.memory_space<vmem>>, %arg4: memref<512x128xbf16, #tpu.memory_space<vmem>>, %arg5: memref<1x1xf32, #tpu.memory_space<smem>>, %arg6: memref<2x128xbf16, #tpu.memory_space<vmem>>) attributes {dimension_semantics = [#tpu.dimension_semantics<parallel>], iteration_bounds = array<i64: 1>, scalar_prefetch = 0 : i64, scratch_operands = 0 : i64, tpu.core_type = #tpu.core_type<tc>, window_params = [{transform_indices = @transform_0, window_bounds = array<i64: 2, 768>}, {pipeline_mode = #tpu.pipeline_mode<synchronous>, transform_indices = @transform_1, window_bounds = array<i64: 768, 512>}, {pipeline_mode = #tpu.pipeline_mode<synchronous>, transform_indices = @transform_2, window_bounds = array<i64: 1, 512>}, {pipeline_mode = #tpu.pipeline_mode<synchronous>, transform_indices = @transform_3, window_bounds = array<i64: 512, 128>}, {transform_indices = @transform_4, window_bounds = array<i64: 1, 1>}, {transform_indices = @transform_5, window_bounds = array<i64: 2, 128>}]} {
    %c0 = arith.constant 0 : index
    %c0_0 = arith.constant 0 : index
    %0 = vector.load %arg1[%c0, %c0_0] : memref<2x768xbf16, #tpu.memory_space<vmem>>, vector<2x768xbf16>
    %c0_1 = arith.constant 0 : index
    %c0_2 = arith.constant 0 : index
    %1 = vector.load %arg2[%c0_1, %c0_2] : memref<768x512xbf16, #tpu.memory_space<vmem>>, vector<768x512xbf16>
    %cst = arith.constant dense<0.000000e+00> : vector<2x512xf32>
    %2 = tpu.matmul %0, %1, %cst {dimension_numbers = #tpu.dot_dimension_numbers<[1], [0], [0], [1], [0, 0, 1, 1], [], []>} : vector<2x768xbf16>, vector<768x512xbf16>, vector<2x512xf32> -> vector<2x512xf32>
    %c0_3 = arith.constant 0 : index
    %c0_4 = arith.constant 0 : index
    %3 = vector.load %arg3[%c0_3, %c0_4] : memref<1x512xf32, #tpu.memory_space<vmem>>, vector<1x512xf32>
    %4 = vector.broadcast %3 : vector<1x512xf32> to vector<2x512xf32>
    %5 = arith.addf %2, %4 : vector<2x512xf32>
    %cst_5 = arith.constant 0.000000e+00 : f32
    %6 = vector.broadcast %cst_5 : f32 to vector<2x512xf32>
    %7 = arith.maximumf %5, %6 : vector<2x512xf32>
    %8 = arith.truncf %7 : vector<2x512xf32> to vector<2x512xbf16>
    %c0_6 = arith.constant 0 : index
    %c0_7 = arith.constant 0 : index
    %9 = vector.load %arg4[%c0_6, %c0_7] : memref<512x128xbf16, #tpu.memory_space<vmem>>, vector<512x128xbf16>
    %cst_8 = arith.constant dense<0.000000e+00> : vector<2x128xf32>
    %10 = tpu.matmul %8, %9, %cst_8 {dimension_numbers = #tpu.dot_dimension_numbers<[1], [0], [0], [1], [0, 0, 1, 1], [], []>} : vector<2x512xbf16>, vector<512x128xbf16>, vector<2x128xf32> -> vector<2x128xf32>
    %c0_9 = arith.constant 0 : index
    %c0_10 = arith.constant 0 : index
    %11 = memref.load %arg5[%c0_9, %c0_10] : memref<1x1xf32, #tpu.memory_space<smem>>
    %12 = vector.broadcast %11 : f32 to vector<2x128xf32>
    %13 = arith.addf %10, %12 : vector<2x128xf32>
    %14 = arith.negf %13 : vector<2x128xf32>
    %15 = math.exp %14 : vector<2x128xf32>
    %cst_11 = arith.constant 1.000000e+00 : f32
    %16 = vector.broadcast %cst_11 : f32 to vector<2x128xf32>
    %17 = arith.addf %16, %15 : vector<2x128xf32>
    %18 = arith.divf %16, %17 : vector<2x128xf32>
    %19 = arith.truncf %18 : vector<2x128xf32> to vector<2x128xbf16>
    %c0_12 = arith.constant 0 : index
    %c0_13 = arith.constant 0 : index
    %20 = vector.load %arg6[%c0_12, %c0_13] : memref<2x128xbf16, #tpu.memory_space<vmem>>, vector<2x128xbf16>
    tpu.vector_store %arg6[%c0_12, %c0_13], %19 {strides = array<i32>} : memref<2x128xbf16, #tpu.memory_space<vmem>>, vector<2x128xbf16>,
    return
  }
  func.func @transform_0(%arg0: i32) -> (i32, i32) {
    %c0_i32 = arith.constant 0 : i32
    %c0_i32_0 = arith.constant 0 : i32
    return %arg0, %c0_i32 : i32, i32
  }
  func.func @transform_1(%arg0: i32) -> (i32, i32) {
    %c0_i32 = arith.constant 0 : i32
    %c0_i32_0 = arith.constant 0 : i32
    %c0_i32_1 = arith.constant 0 : i32
    return %c0_i32, %c0_i32_0 : i32, i32
  }
  func.func @transform_2(%arg0: i32) -> (i32, i32) {
    %c0_i32 = arith.constant 0 : i32
    %c0_i32_0 = arith.constant 0 : i32
    %c0_i32_1 = arith.constant 0 : i32
    return %c0_i32, %c0_i32_0 : i32, i32
  }
  func.func @transform_3(%arg0: i32) -> (i32, i32) {
    %c0_i32 = arith.constant 0 : i32
    %c0_i32_0 = arith.constant 0 : i32
    %c0_i32_1 = arith.constant 0 : i32
    return %c0_i32, %c0_i32_0 : i32, i32
  }
  func.func @transform_4(%arg0: i32) -> (i32, i32) {
    %c0_i32 = arith.constant 0 : i32
    %c0_i32_0 = arith.constant 0 : i32
    %c0_i32_1 = arith.constant 0 : i32
    return %c0_i32, %c0_i32_0 : i32, i32
  }
  func.func @transform_5(%arg0: i32) -> (i32, i32) {
    %c0_i32 = arith.constant 0 : i32
    %c0_i32_0 = arith.constant 0 : i32
    return %arg0, %c0_i32 : i32, i32
  }
}

</mosaic_0001>

<llo_original>
// kernel: tpu_custom_call.1
$region0: #{tpu_custom_call.1}
  #allocation0 [shape = 'u32[]', space=smem, size = 0x4, offset = 0x4, fixed_abs, tag = 'smem constant byte address 0x4 - core index']
  #allocation1 [shape = 'u32[144,128]{1,0:T(1,128)}', space=vmem, size = 0x12000, scoped, tag = 'internal scratch']
  #allocation2 [shape = 'f32[1,1]{1,0:T(1,128)S(6)}', space=smem, size = 0x200, scoped, tag = 'scoped memory for tpu_custom_call.1']
  %s0 = inlined_call_operand.hbm [shape: bf16[2,768], index: 0, kind: input, shape index: {}]
  %s1 = inlined_call_operand.hbm [shape: bf16[768,512], index: 1, kind: input, shape index: {}]
  %s2 = inlined_call_operand.vmem [shape: f32[1,512], index: 2, kind: input, shape index: {}]
  %s3 = inlined_call_operand.hbm [shape: bf16[512,128], index: 3, kind: input, shape index: {}]
  %s4 = inlined_call_operand.<no memory space> [shape: f32[1,1], index: 4, kind: input, shape index: {}]
  %s5 = inlined_call_operand.hbm [shape: bf16[2,128], index: 5, kind: output, shape index: {}]
  %s6 = sld [smem:[#allocation0]]
  $region42: #{tpu_custom_call.1} parent=0
    _
  %s8 = ssub.s32 1, %s6
  %s9 = scalar_select 0, %s8, %s6
  %10 = sst [smem:[#allocation2]] %s4
  $region1: #{tpu_custom_call.1} parent=0
    #allocation3 [shape = 'u8[3072]{0}', space=vmem, size = 0xc00, scoped, tag = 'input window, operand 0, single buffered']
    #allocation4 [shape = 's32[1]{0}', space=sflag, size = 0x4, scoped, tag = 'scoped memory for tpu_custom_call.1']
    #allocation5 [shape = 's32[1]{0}', space=sflag, size = 0x4, scoped, tag = 'scoped memory for tpu_custom_call.1']
    #allocation6 [shape = 'u8[786432]{0}', space=vmem, size = 0xc0000, scoped, tag = 'input window, operand 1, single buffered']
    #allocation7 [shape = 's32[1]{0}', space=sflag, size = 0x4, scoped, tag = 'scoped memory for tpu_custom_call.1']
    #allocation8 [shape = 'u8[131072]{0}', space=vmem, size = 0x20000, scoped, tag = 'input window, operand 3, single buffered']
    #allocation9 [shape = 'u8[512]{0}', space=vmem, size = 0x400, scoped, tag = 'output window, operand 0, single buffered']
    %11 = vsyncpa [#allocation4], 0
    %12 = vsyncpa [#allocation7], 0
    %13 = vsyncpa [#allocation5], 0
    // Predicated region
    $region2: #{tpu_custom_call.1} parent=1 // pred_check
      _
    $region3: #{tpu_custom_call.1} parent=1 // pred_check_branch
      %15 = sbr.rel (0) target = $region5
    $region4: #{tpu_custom_call.1} parent=1 // pred_region
      %s17 = ssub.s32 96, 96
      %18 = vsyncadd [#allocation4], %s17
      %s20 = sshll.u32 [#allocation3], 4
      %s21 = int_to_ptr.vmem [resolvable:$true] %s20
      %23 = dma.hbm_to_vmem [thread:$0]  %s0, 96, %s21, [#allocation4]
    $region5: #{tpu_custom_call.1} parent=1 // pred_fallthru
      _
    // Predicated region
    $region6: #{tpu_custom_call.1} parent=1 // pred_check
      _
    $region7: #{tpu_custom_call.1} parent=1 // pred_check_branch
      %25 = sbr.rel (0) target = $region9
    $region8: #{tpu_custom_call.1} parent=1 // pred_region
      %s27 = ssub.s32 24576, 24576
      %28 = vsyncadd [#allocation7], %s27
      %s29 = sshll.u32 [#allocation6], 4
      %s30 = int_to_ptr.vmem [resolvable:$true] %s29
      %35 = dma.hbm_to_vmem [thread:$0]  %s1, 24576, %s30, [#allocation7], 256, 256, 16
    $region9: #{tpu_custom_call.1} parent=1 // pred_fallthru
      _
    // Predicated region
    $region10: #{tpu_custom_call.1} parent=1 // pred_check
      _
    $region11: #{tpu_custom_call.1} parent=1 // pred_check_branch
      %37 = sbr.rel (0) target = $region13
    $region12: #{tpu_custom_call.1} parent=1 // pred_region
      _
    $region13: #{tpu_custom_call.1} parent=1 // pred_fallthru
      _
    // Predicated region
    $region14: #{tpu_custom_call.1} parent=1 // pred_check
      _
    $region15: #{tpu_custom_call.1} parent=1 // pred_check_branch
      %39 = sbr.rel (0) target = $region17
    $region16: #{tpu_custom_call.1} parent=1 // pred_region
      %s41 = ssub.s32 4096, 4096
      %42 = vsyncadd [#allocation7], %s41
      %s43 = sshll.u32 [#allocation8], 4
      %s44 = int_to_ptr.vmem [resolvable:$true] %s43
      %49 = dma.hbm_to_vmem [thread:$0]  %s3, 4096, %s44, [#allocation7], 64, 64, 4
    $region17: #{tpu_custom_call.1} parent=1 // pred_fallthru
      _
    // Predicated region
    $region18: #{tpu_custom_call.1} parent=1 // pred_check
      _
    $region19: #{tpu_custom_call.1} parent=1 // pred_check_branch
      %51 = sbr.rel (0) target = $region21
    $region20: #{tpu_custom_call.1} parent=1 // pred_region
      _
    $region21: #{tpu_custom_call.1} parent=1 // pred_fallthru
      _
    // Predicated region
    $region22: #{tpu_custom_call.1} parent=1 // pred_check
      _
    $region23: #{tpu_custom_call.1} parent=1 // pred_check_branch
      %53 = sbr.rel (0) target = $region25
    $region24: #{tpu_custom_call.1} parent=1 // pred_region
      %54 = dma.done [#allocation4], 96
    $region25: #{tpu_custom_call.1} parent=1 // pred_fallthru
      _
    // Predicated region
    $region26: #{tpu_custom_call.1} parent=1 // pred_check
      _
    $region27: #{tpu_custom_call.1} parent=1 // pred_check_branch
      %56 = sbr.rel (0) target = $region29
    $region28: #{tpu_custom_call.1} parent=1 // pred_region
      %57 = dma.done [#allocation7], 24576
    $region29: #{tpu_custom_call.1} parent=1 // pred_fallthru
      _
    // Predicated region
    $region30: #{tpu_custom_call.1} parent=1 // pred_check
      _
    $region31: #{tpu_custom_call.1} parent=1 // pred_check_branch
      %59 = sbr.rel (0) target = $region33
    $region32: #{tpu_custom_call.1} parent=1 // pred_region
      %60 = dma.done [#allocation7], 4096
    $region33: #{tpu_custom_call.1} parent=1 // pred_fallthru
      _
    %v62 = vld [vmem:[#allocation3] sm:$0x3f]
    %v63 = vld [vmem:[#allocation6] sm:$0xff]
    %v64 = vld [vmem:[#allocation6 + $0x8] sm:$0xff]
    %v65 = vld [vmem:[#allocation6 + $0x10] sm:$0xff]
    %v66 = vld [vmem:[#allocation6 + $0x18] sm:$0xff]
    %v67 = vld [vmem:[#allocation6 + $0x20] sm:$0xff]
    %v68 = vld [vmem:[#allocation6 + $0x28] sm:$0xff]
    %v69 = vld [vmem:[#allocation6 + $0x30] sm:$0xff]
    %v70 = vld [vmem:[#allocation6 + $0x38] sm:$0xff]
    %v71 = vld [vmem:[#allocation6 + $0x40] sm:$0xff]
    %v72 = vld [vmem:[#allocation6 + $0x48] sm:$0xff]
    %v73 = vld [vmem:[#allocation6 + $0x50] sm:$0xff]
    %v74 = vld [vmem:[#allocation6 + $0x58] sm:$0xff]
    %v75 = vld [vmem:[#allocation6 + $0x60] sm:$0xff]
    %v76 = vld [vmem:[#allocation6 + $0x68] sm:$0xff]
    %v77 = vld [vmem:[#allocation6 + $0x70] sm:$0xff]
    %v78 = vld [vmem:[#allocation6 + $0x78] sm:$0xff]
    %v79 = vld [vmem:[#allocation6 + $0x80] sm:$0xff]
    %v80 = vld [vmem:[#allocation6 + $0x88] sm:$0xff]
    %v81 = vld [vmem:[#allocation6 + $0x90] sm:$0xff]
    %v82 = vld [vmem:[#allocation6 + $0x98] sm:$0xff]
    %v83 = vld [vmem:[#allocation6 + $0xa0] sm:$0xff]
    %v84 = vld [vmem:[#allocation6 + $0xa8] sm:$0xff]
    %v85 = vld [vmem:[#allocation6 + $0xb0] sm:$0xff]
    %v86 = vld [vmem:[#allocation6 + $0xb8] sm:$0xff]
    %v87 = vld [vmem:[#allocation6 + $0xc0] sm:$0xff]
    %v88 = vld [vmem:[#allocation6 + $0xc8] sm:$0xff]
    %v89 = vld [vmem:[#allocation6 + $0xd0] sm:$0xff]
    %v90 = vld [vmem:[#allocation6 + $0xd8] sm:$0xff]
    %v91 = vld [vmem:[#allocation6 + $0xe0] sm:$0xff]
    %v92 = vld [vmem:[#allocation6 + $0xe8] sm:$0xff]
    %v93 = vld [vmem:[#allocation6 + $0xf0] sm:$0xff]
    %v94 = vld [vmem:[#allocation6 + $0xf8] sm:$0xff]
    %v95 = vld [vmem:[#allocation6 + $0x100] sm:$0xff]
    %v96 = vld [vmem:[#allocation6 + $0x108] sm:$0xff]
    %v97 = vld [vmem:[#allocation6 + $0x110] sm:$0xff]
    %v98 = vld [vmem:[#allocation6 + $0x118] sm:$0xff]
    %v99 = vld [vmem:[#allocation6 + $0x120] sm:$0xff]
    %v100 = vld [vmem:[#allocation6 + $0x128] sm:$0xff]
    %v101 = vld [vmem:[#allocation6 + $0x130] sm:$0xff]
    %v102 = vld [vmem:[#allocation6 + $0x138] sm:$0xff]
    %v103 = vld [vmem:[#allocation6 + $0x140] sm:$0xff]
    %v104 = vld [vmem:[#allocation6 + $0x148] sm:$0xff]
    %v105 = vld [vmem:[#allocation6 + $0x150] sm:$0xff]
    %v106 = vld [vmem:[#allocation6 + $0x158] sm:$0xff]
    %v107 = vld [vmem:[#allocation6 + $0x160] sm:$0xff]
    %v108 = vld [vmem:[#allocation6 + $0x168] sm:$0xff]
    %v109 = vld [vmem:[#allocation6 + $0x170] sm:$0xff]
    %v110 = vld [vmem:[#allocation6 + $0x178] sm:$0xff]
    %v111 = vld [vmem:[#allocation6 + $0x180] sm:$0xff]
    %v112 = vld [vmem:[#allocation6 + $0x188] sm:$0xff]
    %v113 = vld [vmem:[#allocation6 + $0x190] sm:$0xff]
    %v114 = vld [vmem:[#allocation6 + $0x198] sm:$0xff]
    %v115 = vld [vmem:[#allocation6 + $0x1a0] sm:$0xff]
    %v116 = vld [vmem:[#allocation6 + $0x1a8] sm:$0xff]
    %v117 = vld [vmem:[#allocation6 + $0x1b0] sm:$0xff]
    %v118 = vld [vmem:[#allocation6 + $0x1b8] sm:$0xff]
    %v119 = vld [vmem:[#allocation6 + $0x1c0] sm:$0xff]
    %v120 = vld [vmem:[#allocation6 + $0x1c8] sm:$0xff]
    %v121 = vld [vmem:[#allocation6 + $0x1d0] sm:$0xff]
    %v122 = vld [vmem:[#allocation6 + $0x1d8] sm:$0xff]
    %v123 = vld [vmem:[#allocation6 + $0x1e0] sm:$0xff]
    %v124 = vld [vmem:[#allocation6 + $0x1e8] sm:$0xff]
    %v125 = vld [vmem:[#allocation6 + $0x1f0] sm:$0xff]
    %v126 = vld [vmem:[#allocation6 + $0x1f8] sm:$0xff]
    %v127 = vld [vmem:[#allocation6 + $0x200] sm:$0xff]
    %v128 = vld [vmem:[#allocation6 + $0x208] sm:$0xff]
    %v129 = vld [vmem:[#allocation6 + $0x210] sm:$0xff]
    %v130 = vld [vmem:[#allocation6 + $0x218] sm:$0xff]
    %v131 = vld [vmem:[#allocation6 + $0x220] sm:$0xff]
    %v132 = vld [vmem:[#allocation6 + $0x228] sm:$0xff]
    %v133 = vld [vmem:[#allocation6 + $0x230] sm:$0xff]
    %v134 = vld [vmem:[#allocation6 + $0x238] sm:$0xff]
    %v135 = vld [vmem:[#allocation6 + $0x240] sm:$0xff]
    %v136 = vld [vmem:[#allocation6 + $0x248] sm:$0xff]
    %v137 = vld [vmem:[#allocation6 + $0x250] sm:$0xff]
    %v138 = vld [vmem:[#allocation6 + $0x258] sm:$0xff]
    %v139 = vld [vmem:[#allocation6 + $0x260] sm:$0xff]
    %v140 = vld [vmem:[#allocation6 + $0x268] sm:$0xff]
    %v141 = vld [vmem:[#allocation6 + $0x270] sm:$0xff]
    %v142 = vld [vmem:[#allocation6 + $0x278] sm:$0xff]
    %v143 = vld [vmem:[#allocation6 + $0x280] sm:$0xff]
    %v144 = vld [vmem:[#allocation6 + $0x288] sm:$0xff]
    %v145 = vld [vmem:[#allocation6 + $0x290] sm:$0xff]
    %v146 = vld [vmem:[#allocation6 + $0x298] sm:$0xff]
    %v147 = vld [vmem:[#allocation6 + $0x2a0] sm:$0xff]
    %v148 = vld [vmem:[#allocation6 + $0x2a8] sm:$0xff]
    %v149 = vld [vmem:[#allocation6 + $0x2b0] sm:$0xff]
    %v150 = vld [vmem:[#allocation6 + $0x2b8] sm:$0xff]
    %v151 = vld [vmem:[#allocation6 + $0x2c0] sm:$0xff]
    %v152 = vld [vmem:[#allocation6 + $0x2c8] sm:$0xff]
    %v153 = vld [vmem:[#allocation6 + $0x2d0] sm:$0xff]
    %v154 = vld [vmem:[#allocation6 + $0x2d8] sm:$0xff]
    %v155 = vld [vmem:[#allocation6 + $0x2e0] sm:$0xff]
    %v156 = vld [vmem:[#allocation6 + $0x2e8] sm:$0xff]
    %v157 = vld [vmem:[#allocation6 + $0x2f0] sm:$0xff]
    %v158 = vld [vmem:[#allocation6 + $0x2f8] sm:$0xff]
    %v159 = vld [vmem:[#allocation6 + $0x300] sm:$0xff]
    %v160 = vld [vmem:[#allocation6 + $0x308] sm:$0xff]
    %v161 = vld [vmem:[#allocation6 + $0x310] sm:$0xff]
    %v162 = vld [vmem:[#allocation6 + $0x318] sm:$0xff]
    %v163 = vld [vmem:[#allocation6 + $0x320] sm:$0xff]
    %v164 = vld [vmem:[#allocation6 + $0x328] sm:$0xff]
    %v165 = vld [vmem:[#allocation6 + $0x330] sm:$0xff]
    %v166 = vld [vmem:[#allocation6 + $0x338] sm:$0xff]
    %v167 = vld [vmem:[#allocation6 + $0x340] sm:$0xff]
    %v168 = vld [vmem:[#allocation6 + $0x348] sm:$0xff]
    %v169 = vld [vmem:[#allocation6 + $0x350] sm:$0xff]
    %v170 = vld [vmem:[#allocation6 + $0x358] sm:$0xff]
    %v171 = vld [vmem:[#allocation6 + $0x360] sm:$0xff]
    %v172 = vld [vmem:[#allocation6 + $0x368] sm:$0xff]
    %v173 = vld [vmem:[#allocation6 + $0x370] sm:$0xff]
    %v174 = vld [vmem:[#allocation6 + $0x378] sm:$0xff]
    %v175 = vld [vmem:[#allocation6 + $0x380] sm:$0xff]
    %v176 = vld [vmem:[#allocation6 + $0x388] sm:$0xff]
    %v177 = vld [vmem:[#allocation6 + $0x390] sm:$0xff]
    %v178 = vld [vmem:[#allocation6 + $0x398] sm:$0xff]
    %v179 = vld [vmem:[#allocation6 + $0x3a0] sm:$0xff]
    %v180 = vld [vmem:[#allocation6 + $0x3a8] sm:$0xff]
    %v181 = vld [vmem:[#allocation6 + $0x3b0] sm:$0xff]
    %v182 = vld [vmem:[#allocation6 + $0x3b8] sm:$0xff]
    %v183 = vld [vmem:[#allocation6 + $0x3c0] sm:$0xff]
    %v184 = vld [vmem:[#allocation6 + $0x3c8] sm:$0xff]
    %v185 = vld [vmem:[#allocation6 + $0x3d0] sm:$0xff]
    %v186 = vld [vmem:[#allocation6 + $0x3d8] sm:$0xff]
    %v187 = vld [vmem:[#allocation6 + $0x3e0] sm:$0xff]
    %v188 = vld [vmem:[#allocation6 + $0x3e8] sm:$0xff]
    %v189 = vld [vmem:[#allocation6 + $0x3f0] sm:$0xff]
    %v190 = vld [vmem:[#allocation6 + $0x3f8] sm:$0xff]
    %v191 = vld [vmem:[#allocation6 + $0x400] sm:$0xff]
    %v192 = vld [vmem:[#allocation6 + $0x408] sm:$0xff]
    %v193 = vld [vmem:[#allocation6 + $0x410] sm:$0xff]
    %v194 = vld [vmem:[#allocation6 + $0x418] sm:$0xff]
    %v195 = vld [vmem:[#allocation6 + $0x420] sm:$0xff]
    %v196 = vld [vmem:[#allocation6 + $0x428] sm:$0xff]
    %v197 = vld [vmem:[#allocation6 + $0x430] sm:$0xff]
    %v198 = vld [vmem:[#allocation6 + $0x438] sm:$0xff]
    %v199 = vld [vmem:[#allocation6 + $0x440] sm:$0xff]
    %v200 = vld [vmem:[#allocation6 + $0x448] sm:$0xff]
    %v201 = vld [vmem:[#allocation6 + $0x450] sm:$0xff]
    %v202 = vld [vmem:[#allocation6 + $0x458] sm:$0xff]
    %v203 = vld [vmem:[#allocation6 + $0x460] sm:$0xff]
    %v204 = vld [vmem:[#allocation6 + $0x468] sm:$0xff]
    %v205 = vld [vmem:[#allocation6 + $0x470] sm:$0xff]
    %v206 = vld [vmem:[#allocation6 + $0x478] sm:$0xff]
    %v207 = vld [vmem:[#allocation6 + $0x480] sm:$0xff]
    %v208 = vld [vmem:[#allocation6 + $0x488] sm:$0xff]
    %v209 = vld [vmem:[#allocation6 + $0x490] sm:$0xff]
    %v210 = vld [vmem:[#allocation6 + $0x498] sm:$0xff]
    %v211 = vld [vmem:[#allocation6 + $0x4a0] sm:$0xff]
    %v212 = vld [vmem:[#allocation6 + $0x4a8] sm:$0xff]
    %v213 = vld [vmem:[#allocation6 + $0x4b0] sm:$0xff]
    %v214 = vld [vmem:[#allocation6 + $0x4b8] sm:$0xff]
    %v215 = vld [vmem:[#allocation6 + $0x4c0] sm:$0xff]
    %v216 = vld [vmem:[#allocation6 + $0x4c8] sm:$0xff]
    %v217 = vld [vmem:[#allocation6 + $0x4d0] sm:$0xff]
    %v218 = vld [vmem:[#allocation6 + $0x4d8] sm:$0xff]
    %v219 = vld [vmem:[#allocation6 + $0x4e0] sm:$0xff]
    %v220 = vld [vmem:[#allocation6 + $0x4e8] sm:$0xff]
    %v221 = vld [vmem:[#allocation6 + $0x4f0] sm:$0xff]
    %v222 = vld [vmem:[#allocation6 + $0x4f8] sm:$0xff]
    %v223 = vld [vmem:[#allocation6 + $0x500] sm:$0xff]
    %v224 = vld [vmem:[#allocation6 + $0x508] sm:$0xff]
    %v225 = vld [vmem:[#allocation6 + $0x510] sm:$0xff]
    %v226 = vld [vmem:[#allocation6 + $0x518] sm:$0xff]
    %v227 = vld [vmem:[#allocation6 + $0x520] sm:$0xff]
    %v228 = vld [vmem:[#allocation6 + $0x528] sm:$0xff]
    %v229 = vld [vmem:[#allocation6 + $0x530] sm:$0xff]
    %v230 = vld [vmem:[#allocation6 + $0x538] sm:$0xff]
    %v231 = vld [vmem:[#allocation6 + $0x540] sm:$0xff]
    %v232 = vld [vmem:[#allocation6 + $0x548] sm:$0xff]
    %v233 = vld [vmem:[#allocation6 + $0x550] sm:$0xff]
    %v234 = vld [vmem:[#allocation6 + $0x558] sm:$0xff]
    %v235 = vld [vmem:[#allocation6 + $0x560] sm:$0xff]
    %v236 = vld [vmem:[#allocation6 + $0x568] sm:$0xff]
    %v237 = vld [vmem:[#allocation6 + $0x570] sm:$0xff]
    %v238 = vld [vmem:[#allocation6 + $0x578] sm:$0xff]
    %v239 = vld [vmem:[#allocation6 + $0x580] sm:$0xff]
    %v240 = vld [vmem:[#allocation6 + $0x588] sm:$0xff]
    %v241 = vld [vmem:[#allocation6 + $0x590] sm:$0xff]
    %v242 = vld [vmem:[#allocation6 + $0x598] sm:$0xff]
    %v243 = vld [vmem:[#allocation6 + $0x5a0] sm:$0xff]
    %v244 = vld [vmem:[#allocation6 + $0x5a8] sm:$0xff]
    %v245 = vld [vmem:[#allocation6 + $0x5b0] sm:$0xff]
    %v246 = vld [vmem:[#allocation6 + $0x5b8] sm:$0xff]
    %v247 = vld [vmem:[#allocation6 + $0x5c0] sm:$0xff]
    %v248 = vld [vmem:[#allocation6 + $0x5c8] sm:$0xff]
    %v249 = vld [vmem:[#allocation6 + $0x5d0] sm:$0xff]
    %v250 = vld [vmem:[#allocation6 + $0x5d8] sm:$0xff]
    %v251 = vld [vmem:[#allocation6 + $0x5e0] sm:$0xff]
    %v252 = vld [vmem:[#allocation6 + $0x5e8] sm:$0xff]
    %v253 = vld [vmem:[#allocation6 + $0x5f0] sm:$0xff]
    %v254 = vld [vmem:[#allocation6 + $0x5f8] sm:$0xff]
    %v255 = vld [vmem:[%s2] sm:$0xf]
    %v257 = vlaneseq
    %v258 = vshrl.u32 %v257, 7
    %v259 = vsub.s32 0, %v258
    %v260 = vrot.slane %v255, %v259
    %v261 = vlaneseq
    %v262 = vshrl.u32 %v261, 7
    %v263 = vsub.s32 1, %v262
    %v264 = vrot.slane %v255, %v263
    %v265 = vlaneseq
    %v266 = vshrl.u32 %v265, 7
    %v267 = vsub.s32 2, %v266
    %v268 = vrot.slane %v255, %v267
    %v269 = vlaneseq
    %v270 = vshrl.u32 %v269, 7
    %v271 = vsub.s32 3, %v270
    %v272 = vrot.slane %v255, %v271
    %v278 = vcombine.high %v62, %v62
    %v280 = vunpack.c.l.s4 1966171168
    %v281 = vunpack.c.0.s8 %v280
    %v282 = vlaneseq
    %v283 = vshrl.u32 %v282, 7
    %v284 = vsub.s32 %v281, %v283
    %v285 = vrot.slane %v62, %v284
    %v287 = vunpack.c.l.s4 1966171168
    %v288 = vunpack.c.0.s8 %v287
    %v289 = vlaneseq
    %v290 = vshrl.u32 %v289, 7
    %v291 = vsub.s32 %v288, %v290
    %v292 = vrot.slane %v278, %v291
    %v293 = vcombine.high %v285, %v285
    %v294 = vcombine.high %v292, %v292
    %v296 = vunpack.c.l.s4 1966171168
    %v297 = vunpack.c.0.s8 %v296
    %v298 = vlaneseq
    %v299 = vshrl.u32 %v298, 7
    %v300 = vsub.s32 %v297, %v299
    %v301 = vrot.slane %v285, %v300
    %v303 = vunpack.c.l.s4 1966171168
    %v304 = vunpack.c.0.s8 %v303
    %v305 = vlaneseq
    %v306 = vshrl.u32 %v305, 7
    %v307 = vsub.s32 %v304, %v306
    %v308 = vrot.slane %v292, %v307
    %v310 = vunpack.c.l.s4 1966171168
    %v311 = vunpack.c.0.s8 %v310
    %v312 = vlaneseq
    %v313 = vshrl.u32 %v312, 7
    %v314 = vsub.s32 %v311, %v313
    %v315 = vrot.slane %v293, %v314
    %v317 = vunpack.c.l.s4 1966171168
    %v318 = vunpack.c.0.s8 %v317
    %v319 = vlaneseq
    %v320 = vshrl.u32 %v319, 7
    %v321 = vsub.s32 %v318, %v320
    %v322 = vrot.slane %v294, %v321
    %v323 = vcombine.high %v301, %v301
    %v324 = vcombine.high %v315, %v315
    %v523 = vunpack.c.l.b16 %v63
    %v524 = vunpack.c.h.b16 %v63
    %v525 = vunpack.c.l.b16 %v64
    %v526 = vunpack.c.h.b16 %v64
    %v527 = vunpack.c.l.b16 %v65
    %v528 = vunpack.c.h.b16 %v65
    %v529 = vunpack.c.l.b16 %v66
    %v530 = vunpack.c.h.b16 %v66
    %v531 = vunpack.c.l.b16 %v67
    %v532 = vunpack.c.h.b16 %v67
    %v533 = vunpack.c.l.b16 %v68
    %v534 = vunpack.c.h.b16 %v68
    %v535 = vunpack.c.l.b16 %v69
    %v536 = vunpack.c.h.b16 %v69
    %v537 = vunpack.c.l.b16 %v70
    %v538 = vunpack.c.h.b16 %v70
    %v539 = vunpack.c.l.b16 %v71
    %v540 = vunpack.c.h.b16 %v71
    %v541 = vunpack.c.l.b16 %v72
    %v542 = vunpack.c.h.b16 %v72
    %v543 = vunpack.c.l.b16 %v73
    %v544 = vunpack.c.h.b16 %v73
    %v545 = vunpack.c.l.b16 %v74
    %v546 = vunpack.c.h.b16 %v74
    %v547 = vunpack.c.l.b16 %v75
    %v548 = vunpack.c.h.b16 %v75
    %v549 = vunpack.c.l.b16 %v76
    %v550 = vunpack.c.h.b16 %v76
    %v551 = vunpack.c.l.b16 %v77
    %v552 = vunpack.c.h.b16 %v77
    %v553 = vunpack.c.l.b16 %v78
    %v554 = vunpack.c.h.b16 %v78
    %v555 = vunpack.c.l.b16 %v79
    %v556 = vunpack.c.h.b16 %v79
    %v557 = vunpack.c.l.b16 %v80
    %v558 = vunpack.c.h.b16 %v80
    %v559 = vunpack.c.l.b16 %v81
    %v560 = vunpack.c.h.b16 %v81
    %v561 = vunpack.c.l.b16 %v82
    %v562 = vunpack.c.h.b16 %v82
    %v563 = vunpack.c.l.b16 %v83
    %v564 = vunpack.c.h.b16 %v83
    %v565 = vunpack.c.l.b16 %v84
    %v566 = vunpack.c.h.b16 %v84
    %v567 = vunpack.c.l.b16 %v85
    %v568 = vunpack.c.h.b16 %v85
    %v569 = vunpack.c.l.b16 %v86
    %v570 = vunpack.c.h.b16 %v86
    %v571 = vunpack.c.l.b16 %v87
    %v572 = vunpack.c.h.b16 %v87
    %v573 = vunpack.c.l.b16 %v88
    %v574 = vunpack.c.h.b16 %v88
    %v575 = vunpack.c.l.b16 %v89
    %v576 = vunpack.c.h.b16 %v89
    %v577 = vunpack.c.l.b16 %v90
    %v578 = vunpack.c.h.b16 %v90
    %v579 = vunpack.c.l.b16 %v91
    %v580 = vunpack.c.h.b16 %v91
    %v581 = vunpack.c.l.b16 %v92
    %v582 = vunpack.c.h.b16 %v92
    %v583 = vunpack.c.l.b16 %v93
    %v584 = vunpack.c.h.b16 %v93
    %v585 = vunpack.c.l.b16 %v94
    %v586 = vunpack.c.h.b16 %v94
    %v587 = vunpack.c.l.b16 %v95
    %v588 = vunpack.c.h.b16 %v95
    %v589 = vunpack.c.l.b16 %v96
    %v590 = vunpack.c.h.b16 %v96
    %v591 = vunpack.c.l.b16 %v97
    %v592 = vunpack.c.h.b16 %v97
    %v593 = vunpack.c.l.b16 %v98
    %v594 = vunpack.c.h.b16 %v98
    %v595 = vunpack.c.l.b16 %v99
    %v596 = vunpack.c.h.b16 %v99
    %v597 = vunpack.c.l.b16 %v100
    %v598 = vunpack.c.h.b16 %v100
    %v599 = vunpack.c.l.b16 %v101
    %v600 = vunpack.c.h.b16 %v101
    %v601 = vunpack.c.l.b16 %v102
    %v602 = vunpack.c.h.b16 %v102
    %v603 = vunpack.c.l.b16 %v103
    %v604 = vunpack.c.h.b16 %v103
    %v605 = vunpack.c.l.b16 %v104
    %v606 = vunpack.c.h.b16 %v104
    %v607 = vunpack.c.l.b16 %v105
    %v608 = vunpack.c.h.b16 %v105
    %v609 = vunpack.c.l.b16 %v106
    %v610 = vunpack.c.h.b16 %v106
    %v611 = vunpack.c.l.b16 %v107
    %v612 = vunpack.c.h.b16 %v107
    %v613 = vunpack.c.l.b16 %v108
    %v614 = vunpack.c.h.b16 %v108
    %v615 = vunpack.c.l.b16 %v109
    %v616 = vunpack.c.h.b16 %v109
    %v617 = vunpack.c.l.b16 %v110
    %v618 = vunpack.c.h.b16 %v110
    %v619 = vunpack.c.l.b16 %v111
    %v620 = vunpack.c.h.b16 %v111
    %v621 = vunpack.c.l.b16 %v112
    %v622 = vunpack.c.h.b16 %v112
    %v623 = vunpack.c.l.b16 %v113
    %v624 = vunpack.c.h.b16 %v113
    %v625 = vunpack.c.l.b16 %v114
    %v626 = vunpack.c.h.b16 %v114
    %v627 = vunpack.c.l.b16 %v115
    %v628 = vunpack.c.h.b16 %v115
    %v629 = vunpack.c.l.b16 %v116
    %v630 = vunpack.c.h.b16 %v116
    %v631 = vunpack.c.l.b16 %v117
    %v632 = vunpack.c.h.b16 %v117
    %v633 = vunpack.c.l.b16 %v118
    %v634 = vunpack.c.h.b16 %v118
    %v635 = vunpack.c.l.b16 %v119
    %v636 = vunpack.c.h.b16 %v119
    %v637 = vunpack.c.l.b16 %v120
    %v638 = vunpack.c.h.b16 %v120
    %v639 = vunpack.c.l.b16 %v121
    %v640 = vunpack.c.h.b16 %v121
    %v641 = vunpack.c.l.b16 %v122
    %v642 = vunpack.c.h.b16 %v122
    %v643 = vunpack.c.l.b16 %v123
    %v644 = vunpack.c.h.b16 %v123
    %v645 = vunpack.c.l.b16 %v124
    %v646 = vunpack.c.h.b16 %v124
    %v647 = vunpack.c.l.b16 %v125
    %v648 = vunpack.c.h.b16 %v125
    %v649 = vunpack.c.l.b16 %v126
    %v650 = vunpack.c.h.b16 %v126
    %v651 = vunpack.c.l.b16 %v127
    %v652 = vunpack.c.h.b16 %v127
    %v653 = vunpack.c.l.b16 %v128
    %v654 = vunpack.c.h.b16 %v128
    %v655 = vunpack.c.l.b16 %v129
    %v656 = vunpack.c.h.b16 %v129
    %v657 = vunpack.c.l.b16 %v130
    %v658 = vunpack.c.h.b16 %v130
    %v659 = vunpack.c.l.b16 %v131
    %v660 = vunpack.c.h.b16 %v131
    %v661 = vunpack.c.l.b16 %v132
    %v662 = vunpack.c.h.b16 %v132
    %v663 = vunpack.c.l.b16 %v133
    %v664 = vunpack.c.h.b16 %v133
    %v665 = vunpack.c.l.b16 %v134
    %v666 = vunpack.c.h.b16 %v134
    %v667 = vunpack.c.l.b16 %v135
    %v668 = vunpack.c.h.b16 %v135
    %v669 = vunpack.c.l.b16 %v136
    %v670 = vunpack.c.h.b16 %v136
    %v671 = vunpack.c.l.b16 %v137
    %v672 = vunpack.c.h.b16 %v137
    %v673 = vunpack.c.l.b16 %v138
    %v674 = vunpack.c.h.b16 %v138
    %v675 = vunpack.c.l.b16 %v139
    %v676 = vunpack.c.h.b16 %v139
    %v677 = vunpack.c.l.b16 %v140
    %v678 = vunpack.c.h.b16 %v140
    %v679 = vunpack.c.l.b16 %v141
    %v680 = vunpack.c.h.b16 %v141
    %v681 = vunpack.c.l.b16 %v142
    %v682 = vunpack.c.h.b16 %v142
    %v683 = vunpack.c.l.b16 %v143
    %v684 = vunpack.c.h.b16 %v143
    %v685 = vunpack.c.l.b16 %v144
    %v686 = vunpack.c.h.b16 %v144
    %v687 = vunpack.c.l.b16 %v145
    %v688 = vunpack.c.h.b16 %v145
    %v689 = vunpack.c.l.b16 %v146
    %v690 = vunpack.c.h.b16 %v146
    %v691 = vunpack.c.l.b16 %v147
    %v692 = vunpack.c.h.b16 %v147
    %v693 = vunpack.c.l.b16 %v148
    %v694 = vunpack.c.h.b16 %v148
    %v695 = vunpack.c.l.b16 %v149
    %v696 = vunpack.c.h.b16 %v149
    %v697 = vunpack.c.l.b16 %v150
    %v698 = vunpack.c.h.b16 %v150
    %v699 = vunpack.c.l.b16 %v151
    %v700 = vunpack.c.h.b16 %v151
    %v701 = vunpack.c.l.b16 %v152
    %v702 = vunpack.c.h.b16 %v152
    %v703 = vunpack.c.l.b16 %v153
    %v704 = vunpack.c.h.b16 %v153
    %v705 = vunpack.c.l.b16 %v154
    %v706 = vunpack.c.h.b16 %v154
    %v707 = vunpack.c.l.b16 %v155
    %v708 = vunpack.c.h.b16 %v155
    %v709 = vunpack.c.l.b16 %v156
    %v710 = vunpack.c.h.b16 %v156
    %v711 = vunpack.c.l.b16 %v157
    %v712 = vunpack.c.h.b16 %v157
    %v713 = vunpack.c.l.b16 %v158
    %v714 = vunpack.c.h.b16 %v158
    %v715 = vunpack.c.l.b16 %v159
    %v716 = vunpack.c.h.b16 %v159
    %v717 = vunpack.c.l.b16 %v160
    %v718 = vunpack.c.h.b16 %v160
    %v719 = vunpack.c.l.b16 %v161
    %v720 = vunpack.c.h.b16 %v161
    %v721 = vunpack.c.l.b16 %v162
    %v722 = vunpack.c.h.b16 %v162
    %v723 = vunpack.c.l.b16 %v163
    %v724 = vunpack.c.h.b16 %v163
    %v725 = vunpack.c.l.b16 %v164
    %v726 = vunpack.c.h.b16 %v164
    %v727 = vunpack.c.l.b16 %v165
    %v728 = vunpack.c.h.b16 %v165
    %v729 = vunpack.c.l.b16 %v166
    %v730 = vunpack.c.h.b16 %v166
    %v731 = vunpack.c.l.b16 %v167
    %v732 = vunpack.c.h.b16 %v167
    %v733 = vunpack.c.l.b16 %v168
    %v734 = vunpack.c.h.b16 %v168
    %v735 = vunpack.c.l.b16 %v169
    %v736 = vunpack.c.h.b16 %v169
    %v737 = vunpack.c.l.b16 %v170
    %v738 = vunpack.c.h.b16 %v170
    %v739 = vunpack.c.l.b16 %v171
    %v740 = vunpack.c.h.b16 %v171
    %v741 = vunpack.c.l.b16 %v172
    %v742 = vunpack.c.h.b16 %v172
    %v743 = vunpack.c.l.b16 %v173
    %v744 = vunpack.c.h.b16 %v173
    %v745 = vunpack.c.l.b16 %v174
    %v746 = vunpack.c.h.b16 %v174
    %v747 = vunpack.c.l.b16 %v175
    %v748 = vunpack.c.h.b16 %v175
    %v749 = vunpack.c.l.b16 %v176
    %v750 = vunpack.c.h.b16 %v176
    %v751 = vunpack.c.l.b16 %v177
    %v752 = vunpack.c.h.b16 %v177
    %v753 = vunpack.c.l.b16 %v178
    %v754 = vunpack.c.h.b16 %v178
    %v755 = vunpack.c.l.b16 %v179
    %v756 = vunpack.c.h.b16 %v179
    %v757 = vunpack.c.l.b16 %v180
    %v758 = vunpack.c.h.b16 %v180
    %v759 = vunpack.c.l.b16 %v181
    %v760 = vunpack.c.h.b16 %v181
    %v761 = vunpack.c.l.b16 %v182
    %v762 = vunpack.c.h.b16 %v182
    %v763 = vunpack.c.l.b16 %v183
    %v764 = vunpack.c.h.b16 %v183
    %v765 = vunpack.c.l.b16 %v184
    %v766 = vunpack.c.h.b16 %v184
    %v767 = vunpack.c.l.b16 %v185
    %v768 = vunpack.c.h.b16 %v185
    %v769 = vunpack.c.l.b16 %v186
    %v770 = vunpack.c.h.b16 %v186
    %v771 = vunpack.c.l.b16 %v187
    %v772 = vunpack.c.h.b16 %v187
    %v773 = vunpack.c.l.b16 %v188
    %v774 = vunpack.c.h.b16 %v188
    %v775 = vunpack.c.l.b16 %v189
    %v776 = vunpack.c.h.b16 %v189
    %v777 = vunpack.c.l.b16 %v190
    %v778 = vunpack.c.h.b16 %v190
    %v779 = vunpack.c.l.b16 %v191
    %v780 = vunpack.c.h.b16 %v191
    %v781 = vunpack.c.l.b16 %v192
    %v782 = vunpack.c.h.b16 %v192
    %v783 = vunpack.c.l.b16 %v193
    %v784 = vunpack.c.h.b16 %v193
    %v785 = vunpack.c.l.b16 %v194
    %v786 = vunpack.c.h.b16 %v194
    %v787 = vunpack.c.l.b16 %v195
    %v788 = vunpack.c.h.b16 %v195
    %v789 = vunpack.c.l.b16 %v196
    %v790 = vunpack.c.h.b16 %v196
    %v791 = vunpack.c.l.b16 %v197
    %v792 = vunpack.c.h.b16 %v197
    %v793 = vunpack.c.l.b16 %v198
    %v794 = vunpack.c.h.b16 %v198
    %v795 = vunpack.c.l.b16 %v199
    %v796 = vunpack.c.h.b16 %v199
    %v797 = vunpack.c.l.b16 %v200
    %v798 = vunpack.c.h.b16 %v200
    %v799 = vunpack.c.l.b16 %v201
    %v800 = vunpack.c.h.b16 %v201
    %v801 = vunpack.c.l.b16 %v202
    %v802 = vunpack.c.h.b16 %v202
    %v803 = vunpack.c.l.b16 %v203
    %v804 = vunpack.c.h.b16 %v203
    %v805 = vunpack.c.l.b16 %v204
    %v806 = vunpack.c.h.b16 %v204
    %v807 = vunpack.c.l.b16 %v205
    %v808 = vunpack.c.h.b16 %v205
    %v809 = vunpack.c.l.b16 %v206
    %v810 = vunpack.c.h.b16 %v206
    %v811 = vunpack.c.l.b16 %v207
    %v812 = vunpack.c.h.b16 %v207
    %v813 = vunpack.c.l.b16 %v208
    %v814 = vunpack.c.h.b16 %v208
    %v815 = vunpack.c.l.b16 %v209
    %v816 = vunpack.c.h.b16 %v209
    %v817 = vunpack.c.l.b16 %v210
    %v818 = vunpack.c.h.b16 %v210
    %v819 = vunpack.c.l.b16 %v211
    %v820 = vunpack.c.h.b16 %v211
    %v821 = vunpack.c.l.b16 %v212
    %v822 = vunpack.c.h.b16 %v212
    %v823 = vunpack.c.l.b16 %v213
    %v824 = vunpack.c.h.b16 %v213
    %v825 = vunpack.c.l.b16 %v214
    %v826 = vunpack.c.h.b16 %v214
    %v827 = vunpack.c.l.b16 %v215
    %v828 = vunpack.c.h.b16 %v215
    %v829 = vunpack.c.l.b16 %v216
    %v830 = vunpack.c.h.b16 %v216
    %v831 = vunpack.c.l.b16 %v217
    %v832 = vunpack.c.h.b16 %v217
    %v833 = vunpack.c.l.b16 %v218
    %v834 = vunpack.c.h.b16 %v218
    %v835 = vunpack.c.l.b16 %v219
    %v836 = vunpack.c.h.b16 %v219
    %v837 = vunpack.c.l.b16 %v220
    %v838 = vunpack.c.h.b16 %v220
    %v839 = vunpack.c.l.b16 %v221
    %v840 = vunpack.c.h.b16 %v221
    %v841 = vunpack.c.l.b16 %v222
    %v842 = vunpack.c.h.b16 %v222
    %v843 = vunpack.c.l.b16 %v223
    %v844 = vunpack.c.h.b16 %v223
    %v845 = vunpack.c.l.b16 %v224
    %v846 = vunpack.c.h.b16 %v224
    %v847 = vunpack.c.l.b16 %v225
    %v848 = vunpack.c.h.b16 %v225
    %v849 = vunpack.c.l.b16 %v226
    %v850 = vunpack.c.h.b16 %v226
    %v851 = vunpack.c.l.b16 %v227
    %v852 = vunpack.c.h.b16 %v227
    %v853 = vunpack.c.l.b16 %v228
    %v854 = vunpack.c.h.b16 %v228
    %v855 = vunpack.c.l.b16 %v229
    %v856 = vunpack.c.h.b16 %v229
    %v857 = vunpack.c.l.b16 %v230
    %v858 = vunpack.c.h.b16 %v230
    %v859 = vunpack.c.l.b16 %v231
    %v860 = vunpack.c.h.b16 %v231
    %v861 = vunpack.c.l.b16 %v232
    %v862 = vunpack.c.h.b16 %v232
    %v863 = vunpack.c.l.b16 %v233
    %v864 = vunpack.c.h.b16 %v233
    %v865 = vunpack.c.l.b16 %v234
    %v866 = vunpack.c.h.b16 %v234
    %v867 = vunpack.c.l.b16 %v235
    %v868 = vunpack.c.h.b16 %v235
    %v869 = vunpack.c.l.b16 %v236
    %v870 = vunpack.c.h.b16 %v236
    %v871 = vunpack.c.l.b16 %v237
    %v872 = vunpack.c.h.b16 %v237
    %v873 = vunpack.c.l.b16 %v238
    %v874 = vunpack.c.h.b16 %v238
    %v875 = vunpack.c.l.b16 %v239
    %v876 = vunpack.c.h.b16 %v239
    %v877 = vunpack.c.l.b16 %v240
    %v878 = vunpack.c.h.b16 %v240
    %v879 = vunpack.c.l.b16 %v241
    %v880 = vunpack.c.h.b16 %v241
    %v881 = vunpack.c.l.b16 %v242
    %v882 = vunpack.c.h.b16 %v242
    %v883 = vunpack.c.l.b16 %v243
    %v884 = vunpack.c.h.b16 %v243
    %v885 = vunpack.c.l.b16 %v244
    %v886 = vunpack.c.h.b16 %v244
    %v887 = vunpack.c.l.b16 %v245
    %v888 = vunpack.c.h.b16 %v245
    %v889 = vunpack.c.l.b16 %v246
    %v890 = vunpack.c.h.b16 %v246
    %v891 = vunpack.c.l.b16 %v247
    %v892 = vunpack.c.h.b16 %v247
    %v893 = vunpack.c.l.b16 %v248
    %v894 = vunpack.c.h.b16 %v248
    %v895 = vunpack.c.l.b16 %v249
    %v896 = vunpack.c.h.b16 %v249
    %v897 = vunpack.c.l.b16 %v250
    %v898 = vunpack.c.h.b16 %v250
    %v899 = vunpack.c.l.b16 %v251
    %v900 = vunpack.c.h.b16 %v251
    %v901 = vunpack.c.l.b16 %v252
    %v902 = vunpack.c.h.b16 %v252
    %v903 = vunpack.c.l.b16 %v253
    %v904 = vunpack.c.h.b16 %v253
    %v905 = vunpack.c.l.b16 %v254
    %v906 = vunpack.c.h.b16 %v254
    %v907 = vpack.c.b16 %v527, %v523
    %v908 = vpack.c.b16 %v528, %v524
    %v909 = vpack.c.b16 %v529, %v525
    %v910 = vpack.c.b16 %v530, %v526
    %v911 = vpack.c.b16 %v535, %v531
    %v912 = vpack.c.b16 %v536, %v532
    %v913 = vpack.c.b16 %v537, %v533
    %v914 = vpack.c.b16 %v538, %v534
    %v915 = vpack.c.b16 %v543, %v539
    %v916 = vpack.c.b16 %v544, %v540
    %v917 = vpack.c.b16 %v545, %v541
    %v918 = vpack.c.b16 %v546, %v542
    %v919 = vpack.c.b16 %v551, %v547
    %v920 = vpack.c.b16 %v552, %v548
    %v921 = vpack.c.b16 %v553, %v549
    %v922 = vpack.c.b16 %v554, %v550
    %v923 = vpack.c.b16 %v559, %v555
    %v924 = vpack.c.b16 %v560, %v556
    %v925 = vpack.c.b16 %v561, %v557
    %v926 = vpack.c.b16 %v562, %v558
    %v927 = vpack.c.b16 %v567, %v563
    %v928 = vpack.c.b16 %v568, %v564
    %v929 = vpack.c.b16 %v569, %v565
    %v930 = vpack.c.b16 %v570, %v566
    %v931 = vpack.c.b16 %v575, %v571
    %v932 = vpack.c.b16 %v576, %v572
    %v933 = vpack.c.b16 %v577, %v573
    %v934 = vpack.c.b16 %v578, %v574
    %v935 = vpack.c.b16 %v583, %v579
    %v936 = vpack.c.b16 %v584, %v580
    %v937 = vpack.c.b16 %v585, %v581
    %v938 = vpack.c.b16 %v586, %v582
    %v939 = vpack.c.b16 %v591, %v587
    %v940 = vpack.c.b16 %v592, %v588
    %v941 = vpack.c.b16 %v593, %v589
    %v942 = vpack.c.b16 %v594, %v590
    %v943 = vpack.c.b16 %v599, %v595
    %v944 = vpack.c.b16 %v600, %v596
    %v945 = vpack.c.b16 %v601, %v597
    %v946 = vpack.c.b16 %v602, %v598
    %v947 = vpack.c.b16 %v607, %v603
    %v948 = vpack.c.b16 %v608, %v604
    %v949 = vpack.c.b16 %v609, %v605
    %v950 = vpack.c.b16 %v610, %v606
    %v951 = vpack.c.b16 %v615, %v611
    %v952 = vpack.c.b16 %v616, %v612
    %v953 = vpack.c.b16 %v617, %v613
    %v954 = vpack.c.b16 %v618, %v614
    %v955 = vpack.c.b16 %v623, %v619
    %v956 = vpack.c.b16 %v624, %v620
    %v957 = vpack.c.b16 %v625, %v621
    %v958 = vpack.c.b16 %v626, %v622
    %v959 = vpack.c.b16 %v631, %v627
    %v960 = vpack.c.b16 %v632, %v628
    %v961 = vpack.c.b16 %v633, %v629
    %v962 = vpack.c.b16 %v634, %v630
    %v963 = vpack.c.b16 %v639, %v635
    %v964 = vpack.c.b16 %v640, %v636
    %v965 = vpack.c.b16 %v641, %v637
    %v966 = vpack.c.b16 %v642, %v638
    %v967 = vpack.c.b16 %v647, %v643
    %v968 = vpack.c.b16 %v648, %v644
    %v969 = vpack.c.b16 %v649, %v645
    %v970 = vpack.c.b16 %v650, %v646
    %v971 = vpack.c.b16 %v655, %v651
    %v972 = vpack.c.b16 %v656, %v652
    %v973 = vpack.c.b16 %v657, %v653
    %v974 = vpack.c.b16 %v658, %v654
    %v975 = vpack.c.b16 %v663, %v659
    %v976 = vpack.c.b16 %v664, %v660
    %v977 = vpack.c.b16 %v665, %v661
    %v978 = vpack.c.b16 %v666, %v662
    %v979 = vpack.c.b16 %v671, %v667
    %v980 = vpack.c.b16 %v672, %v668
    %v981 = vpack.c.b16 %v673, %v669
    %v982 = vpack.c.b16 %v674, %v670
    %v983 = vpack.c.b16 %v679, %v675
    %v984 = vpack.c.b16 %v680, %v676
    %v985 = vpack.c.b16 %v681, %v677
    %v986 = vpack.c.b16 %v682, %v678
    %v987 = vpack.c.b16 %v687, %v683
    %v988 = vpack.c.b16 %v688, %v684
    %v989 = vpack.c.b16 %v689, %v685
    %v990 = vpack.c.b16 %v690, %v686
    %v991 = vpack.c.b16 %v695, %v691
    %v992 = vpack.c.b16 %v696, %v692
    %v993 = vpack.c.b16 %v697, %v693
    %v994 = vpack.c.b16 %v698, %v694
    %v995 = vpack.c.b16 %v703, %v699
    %v996 = vpack.c.b16 %v704, %v700
    %v997 = vpack.c.b16 %v705, %v701
    %v998 = vpack.c.b16 %v706, %v702
    %v999 = vpack.c.b16 %v711, %v707
    %v1000 = vpack.c.b16 %v712, %v708
    %v1001 = vpack.c.b16 %v713, %v709
    %v1002 = vpack.c.b16 %v714, %v710
    %v1003 = vpack.c.b16 %v719, %v715
    %v1004 = vpack.c.b16 %v720, %v716
    %v1005 = vpack.c.b16 %v721, %v717
    %v1006 = vpack.c.b16 %v722, %v718
    %v1007 = vpack.c.b16 %v727, %v723
    %v1008 = vpack.c.b16 %v728, %v724
    %v1009 = vpack.c.b16 %v729, %v725
    %v1010 = vpack.c.b16 %v730, %v726
    %v1011 = vpack.c.b16 %v735, %v731
    %v1012 = vpack.c.b16 %v736, %v732
    %v1013 = vpack.c.b16 %v737, %v733
    %v1014 = vpack.c.b16 %v738, %v734
    %v1015 = vpack.c.b16 %v743, %v739
    %v1016 = vpack.c.b16 %v744, %v740
    %v1017 = vpack.c.b16 %v745, %v741
    %v1018 = vpack.c.b16 %v746, %v742
    %v1019 = vpack.c.b16 %v751, %v747
    %v1020 = vpack.c.b16 %v752, %v748
    %v1021 = vpack.c.b16 %v753, %v749
    %v1022 = vpack.c.b16 %v754, %v750
    %v1023 = vpack.c.b16 %v759, %v755
    %v1024 = vpack.c.b16 %v760, %v756
    %v1025 = vpack.c.b16 %v761, %v757
    %v1026 = vpack.c.b16 %v762, %v758
    %v1027 = vpack.c.b16 %v767, %v763
    %v1028 = vpack.c.b16 %v768, %v764
    %v1029 = vpack.c.b16 %v769, %v765
    %v1030 = vpack.c.b16 %v770, %v766
    %v1031 = vpack.c.b16 %v775, %v771
    %v1032 = vpack.c.b16 %v776, %v772
    %v1033 = vpack.c.b16 %v777, %v773
    %v1034 = vpack.c.b16 %v778, %v774
    %v1035 = vpack.c.b16 %v783, %v779
    %v1036 = vpack.c.b16 %v784, %v780
    %v1037 = vpack.c.b16 %v785, %v781
    %v1038 = vpack.c.b16 %v786, %v782
    %v1039 = vpack.c.b16 %v791, %v787
    %v1040 = vpack.c.b16 %v792, %v788
    %v1041 = vpack.c.b16 %v793, %v789
    %v1042 = vpack.c.b16 %v794, %v790
    %v1043 = vpack.c.b16 %v799, %v795
    %v1044 = vpack.c.b16 %v800, %v796
    %v1045 = vpack.c.b16 %v801, %v797
    %v1046 = vpack.c.b16 %v802, %v798
    %v1047 = vpack.c.b16 %v807, %v803
    %v1048 = vpack.c.b16 %v808, %v804
    %v1049 = vpack.c.b16 %v809, %v805
    %v1050 = vpack.c.b16 %v810, %v806
    %v1051 = vpack.c.b16 %v815, %v811
    %v1052 = vpack.c.b16 %v816, %v812
    %v1053 = vpack.c.b16 %v817, %v813
    %v1054 = vpack.c.b16 %v818, %v814
    %v1055 = vpack.c.b16 %v823, %v819
    %v1056 = vpack.c.b16 %v824, %v820
    %v1057 = vpack.c.b16 %v825, %v821
    %v1058 = vpack.c.b16 %v826, %v822
    %v1059 = vpack.c.b16 %v831, %v827
    %v1060 = vpack.c.b16 %v832, %v828
    %v1061 = vpack.c.b16 %v833, %v829
    %v1062 = vpack.c.b16 %v834, %v830
    %v1063 = vpack.c.b16 %v839, %v835
    %v1064 = vpack.c.b16 %v840, %v836
    %v1065 = vpack.c.b16 %v841, %v837
    %v1066 = vpack.c.b16 %v842, %v838
    %v1067 = vpack.c.b16 %v847, %v843
    %v1068 = vpack.c.b16 %v848, %v844
    %v1069 = vpack.c.b16 %v849, %v845
    %v1070 = vpack.c.b16 %v850, %v846
    %v1071 = vpack.c.b16 %v855, %v851
    %v1072 = vpack.c.b16 %v856, %v852
    %v1073 = vpack.c.b16 %v857, %v853
    %v1074 = vpack.c.b16 %v858, %v854
    %v1075 = vpack.c.b16 %v863, %v859
    %v1076 = vpack.c.b16 %v864, %v860
    %v1077 = vpack.c.b16 %v865, %v861
    %v1078 = vpack.c.b16 %v866, %v862
    %v1079 = vpack.c.b16 %v871, %v867
    %v1080 = vpack.c.b16 %v872, %v868
    %v1081 = vpack.c.b16 %v873, %v869
    %v1082 = vpack.c.b16 %v874, %v870
    %v1083 = vpack.c.b16 %v879, %v875
    %v1084 = vpack.c.b16 %v880, %v876
    %v1085 = vpack.c.b16 %v881, %v877
    %v1086 = vpack.c.b16 %v882, %v878
    %v1087 = vpack.c.b16 %v887, %v883
    %v1088 = vpack.c.b16 %v888, %v884
    %v1089 = vpack.c.b16 %v889, %v885
    %v1090 = vpack.c.b16 %v890, %v886
    %v1091 = vpack.c.b16 %v895, %v891
    %v1092 = vpack.c.b16 %v896, %v892
    %v1093 = vpack.c.b16 %v897, %v893
    %v1094 = vpack.c.b16 %v898, %v894
    %v1095 = vpack.c.b16 %v903, %v899
    %v1096 = vpack.c.b16 %v904, %v900
    %v1097 = vpack.c.b16 %v905, %v901
    %v1098 = vpack.c.b16 %v906, %v902
    %1291 = vmatprep.subr.bf16.mxu0 %v908
    %1292 = vmatpush1.bf16.msra.mxu0 %v907
    %1293 = vmatprep.subr.bf16.mxu0 %v912
    %1294 = vmatpush1.bf16.msra.mxu0 %v911
    %1295 = vmatprep.subr.bf16.mxu0 %v916
    %1296 = vmatpush1.bf16.msra.mxu0 %v915
    %1297 = vmatprep.subr.bf16.mxu0 %v920
    %1298 = vmatpush1.bf16.msra.mxu0 %v919
    %1299 = vmatprep.subr.bf16.mxu0 %v924
    %1300 = vmatpush1.bf16.msra.mxu0 %v923
    %1301 = vmatprep.subr.bf16.mxu0 %v928
    %1302 = vmatpush1.bf16.msra.mxu0 %v927
    %1303 = vmatprep.subr.bf16.mxu0 %v932
    %1304 = vmatpush1.bf16.msra.mxu0 %v931
    %1305 = vmatprep.subr.bf16.mxu0 %v936
    %1306 = vmatpush1.bf16.msra.mxu0 %v935
    %1307 = vmatprep.subr.bf16.mxu0 %v940
    %1308 = vmatpush1.bf16.msra.mxu0 %v939
    %1309 = vmatprep.subr.bf16.mxu0 %v944
    %1310 = vmatpush1.bf16.msra.mxu0 %v943
    %1311 = vmatprep.subr.bf16.mxu0 %v948
    %1312 = vmatpush1.bf16.msra.mxu0 %v947
    %1313 = vmatprep.subr.bf16.mxu0 %v952
    %1314 = vmatpush1.bf16.msra.mxu0 %v951
    %1315 = vmatprep.subr.bf16.mxu0 %v956
    %1316 = vmatpush1.bf16.msra.mxu0 %v955
    %1317 = vmatprep.subr.bf16.mxu0 %v960
    %1318 = vmatpush1.bf16.msra.mxu0 %v959
    %1319 = vmatprep.subr.bf16.mxu0 %v964
    %1320 = vmatpush1.bf16.msra.mxu0 %v963
    %1321 = vmatprep.subr.bf16.mxu0 %v968
    %1322 = vmatpush1.bf16.msra.mxu0 %v967
    %1323 = vmatprep.mubr.bf16.mxu0 %v315
    %1324 = vmatmul.mubr.bf16.gmra.mrb[0].mxu0 %v301
    %v1325 = vpop.f32.mrb[0].mxu0
    %v1326 = vadd.f32 %v260, %v1325
    %v1327 = vpop.f32.mrb[0].mxu0
    %v1328 = vadd.f32 %v264, %v1327
    %v1329 = vpop.f32.mrb[0].mxu0
    %v1330 = vpop.f32.mrb[0].mxu0
    %1331 = vdwg.mxu0
    %1332 = vmatprep.subr.bf16.mxu0 %v972
    %1333 = vmatpush1.bf16.msra.mxu0 %v971
    %1334 = vmatprep.subr.bf16.mxu0 %v976
    %1335 = vmatpush1.bf16.msra.mxu0 %v975
    %1336 = vmatprep.subr.bf16.mxu0 %v980
    %1337 = vmatpush1.bf16.msra.mxu0 %v979
    %1338 = vmatprep.subr.bf16.mxu0 %v984
    %1339 = vmatpush1.bf16.msra.mxu0 %v983
    %1340 = vmatprep.subr.bf16.mxu0 %v988
    %1341 = vmatpush1.bf16.msra.mxu0 %v987
    %1342 = vmatprep.subr.bf16.mxu0 %v992
    %1343 = vmatpush1.bf16.msra.mxu0 %v991
    %1344 = vmatprep.subr.bf16.mxu0 %v996
    %1345 = vmatpush1.bf16.msra.mxu0 %v995
    %1346 = vmatprep.subr.bf16.mxu0 %v1000
    %1347 = vmatpush1.bf16.msra.mxu0 %v999
    %1348 = vmatprep.subr.bf16.mxu0 %v1004
    %1349 = vmatpush1.bf16.msra.mxu0 %v1003
    %1350 = vmatprep.subr.bf16.mxu0 %v1008
    %1351 = vmatpush1.bf16.msra.mxu0 %v1007
    %1352 = vmatprep.subr.bf16.mxu0 %v1012
    %1353 = vmatpush1.bf16.msra.mxu0 %v1011
    %1354 = vmatprep.subr.bf16.mxu0 %v1016
    %1355 = vmatpush1.bf16.msra.mxu0 %v1015
    %1356 = vmatprep.subr.bf16.mxu0 %v1020
    %1357 = vmatpush1.bf16.msra.mxu0 %v1019
    %1358 = vmatprep.subr.bf16.mxu0 %v1024
    %1359 = vmatpush1.bf16.msra.mxu0 %v1023
    %1360 = vmatprep.subr.bf16.mxu0 %v1028
    %1361 = vmatpush1.bf16.msra.mxu0 %v1027
    %1362 = vmatprep.subr.bf16.mxu0 %v1032
    %1363 = vmatpush1.bf16.msra.mxu0 %v1031
    %1364 = vmatprep.mubr.bf16.mxu0 %v324
    %1365 = vmatmul.mubr.bf16.gmra.mrb[0].mxu0 %v323
    %v1366 = vpop.f32.mrb[0].mxu0
    %v1367 = vadd.f32 %v1326, %v1366
    %v1368 = vpop.f32.mrb[0].mxu0
    %v1369 = vadd.f32 %v1328, %v1368
    %v1370 = vpop.f32.mrb[0].mxu0
    %v1371 = vpop.f32.mrb[0].mxu0
    %1372 = vdwg.mxu0
    %1373 = vmatprep.subr.bf16.mxu0 %v1036
    %1374 = vmatpush1.bf16.msra.mxu0 %v1035
    %1375 = vmatprep.subr.bf16.mxu0 %v1040
    %1376 = vmatpush1.bf16.msra.mxu0 %v1039
    %1377 = vmatprep.subr.bf16.mxu0 %v1044
    %1378 = vmatpush1.bf16.msra.mxu0 %v1043
    %1379 = vmatprep.subr.bf16.mxu0 %v1048
    %1380 = vmatpush1.bf16.msra.mxu0 %v1047
    %1381 = vmatprep.subr.bf16.mxu0 %v1052
    %1382 = vmatpush1.bf16.msra.mxu0 %v1051
    %1383 = vmatprep.subr.bf16.mxu0 %v1056
    %1384 = vmatpush1.bf16.msra.mxu0 %v1055
    %1385 = vmatprep.subr.bf16.mxu0 %v1060
    %1386 = vmatpush1.bf16.msra.mxu0 %v1059
    %1387 = vmatprep.subr.bf16.mxu0 %v1064
    %1388 = vmatpush1.bf16.msra.mxu0 %v1063
    %1389 = vmatprep.subr.bf16.mxu0 %v1068
    %1390 = vmatpush1.bf16.msra.mxu0 %v1067
    %1391 = vmatprep.subr.bf16.mxu0 %v1072
    %1392 = vmatpush1.bf16.msra.mxu0 %v1071
    %1393 = vmatprep.subr.bf16.mxu0 %v1076
    %1394 = vmatpush1.bf16.msra.mxu0 %v1075
    %1395 = vmatprep.subr.bf16.mxu0 %v1080
    %1396 = vmatpush1.bf16.msra.mxu0 %v1079
    %1397 = vmatprep.subr.bf16.mxu0 %v1084
    %1398 = vmatpush1.bf16.msra.mxu0 %v1083
    %1399 = vmatprep.subr.bf16.mxu0 %v1088
    %1400 = vmatpush1.bf16.msra.mxu0 %v1087
    %1401 = vmatprep.subr.bf16.mxu0 %v1092
    %1402 = vmatpush1.bf16.msra.mxu0 %v1091
    %1403 = vmatprep.subr.bf16.mxu0 %v1096
    %1404 = vmatpush1.bf16.msra.mxu0 %v1095
    %1405 = vmatprep.mubr.bf16.mxu0 %v322
    %1406 = vmatmul.mubr.bf16.gmra.mrb[0].mxu0 %v308
    %v1407 = vpop.f32.mrb[0].mxu0
    %v1408 = vadd.f32 %v1367, %v1407
    %v1409 = vpop.f32.mrb[0].mxu0
    %v1410 = vadd.f32 %v1369, %v1409
    %v1411 = vpop.f32.mrb[0].mxu0
    %v1412 = vpop.f32.mrb[0].mxu0
    %1413 = vdwg.mxu0
    %1414 = vmatprep.subr.bf16.mxu0 %v910
    %1415 = vmatpush1.bf16.msra.mxu0 %v909
    %1416 = vmatprep.subr.bf16.mxu0 %v914
    %1417 = vmatpush1.bf16.msra.mxu0 %v913
    %1418 = vmatprep.subr.bf16.mxu0 %v918
    %1419 = vmatpush1.bf16.msra.mxu0 %v917
    %1420 = vmatprep.subr.bf16.mxu0 %v922
    %1421 = vmatpush1.bf16.msra.mxu0 %v921
    %1422 = vmatprep.subr.bf16.mxu0 %v926
    %1423 = vmatpush1.bf16.msra.mxu0 %v925
    %1424 = vmatprep.subr.bf16.mxu0 %v930
    %1425 = vmatpush1.bf16.msra.mxu0 %v929
    %1426 = vmatprep.subr.bf16.mxu0 %v934
    %1427 = vmatpush1.bf16.msra.mxu0 %v933
    %1428 = vmatprep.subr.bf16.mxu0 %v938
    %1429 = vmatpush1.bf16.msra.mxu0 %v937
    %1430 = vmatprep.subr.bf16.mxu0 %v942
    %1431 = vmatpush1.bf16.msra.mxu0 %v941
    %1432 = vmatprep.subr.bf16.mxu0 %v946
    %1433 = vmatpush1.bf16.msra.mxu0 %v945
    %1434 = vmatprep.subr.bf16.mxu0 %v950
    %1435 = vmatpush1.bf16.msra.mxu0 %v949
    %1436 = vmatprep.subr.bf16.mxu0 %v954
    %1437 = vmatpush1.bf16.msra.mxu0 %v953
    %1438 = vmatprep.subr.bf16.mxu0 %v958
    %1439 = vmatpush1.bf16.msra.mxu0 %v957
    %1440 = vmatprep.subr.bf16.mxu0 %v962
    %1441 = vmatpush1.bf16.msra.mxu0 %v961
    %1442 = vmatprep.subr.bf16.mxu0 %v966
    %1443 = vmatpush1.bf16.msra.mxu0 %v965
    %1444 = vmatprep.subr.bf16.mxu0 %v970
    %1445 = vmatpush1.bf16.msra.mxu0 %v969
    %1446 = vmatprep.mubr.bf16.mxu0 %v315
    %1447 = vmatmul.mubr.bf16.gmra.mrb[0].mxu0 %v301
    %v1448 = vpop.f32.mrb[0].mxu0
    %v1449 = vadd.f32 %v268, %v1448
    %v1450 = vpop.f32.mrb[0].mxu0
    %v1451 = vadd.f32 %v272, %v1450
    %v1452 = vpop.f32.mrb[0].mxu0
    %v1453 = vpop.f32.mrb[0].mxu0
    %1454 = vdwg.mxu0
    %1455 = vmatprep.subr.bf16.mxu0 %v974
    %1456 = vmatpush1.bf16.msra.mxu0 %v973
    %1457 = vmatprep.subr.bf16.mxu0 %v978
    %1458 = vmatpush1.bf16.msra.mxu0 %v977
    %1459 = vmatprep.subr.bf16.mxu0 %v982
    %1460 = vmatpush1.bf16.msra.mxu0 %v981
    %1461 = vmatprep.subr.bf16.mxu0 %v986
    %1462 = vmatpush1.bf16.msra.mxu0 %v985
    %1463 = vmatprep.subr.bf16.mxu0 %v990
    %1464 = vmatpush1.bf16.msra.mxu0 %v989
    %1465 = vmatprep.subr.bf16.mxu0 %v994
    %1466 = vmatpush1.bf16.msra.mxu0 %v993
    %1467 = vmatprep.subr.bf16.mxu0 %v998
    %1468 = vmatpush1.bf16.msra.mxu0 %v997
    %1469 = vmatprep.subr.bf16.mxu0 %v1002
    %1470 = vmatpush1.bf16.msra.mxu0 %v1001
    %1471 = vmatprep.subr.bf16.mxu0 %v1006
    %1472 = vmatpush1.bf16.msra.mxu0 %v1005
    %1473 = vmatprep.subr.bf16.mxu0 %v1010
    %1474 = vmatpush1.bf16.msra.mxu0 %v1009
    %1475 = vmatprep.subr.bf16.mxu0 %v1014
    %1476 = vmatpush1.bf16.msra.mxu0 %v1013
    %1477 = vmatprep.subr.bf16.mxu0 %v1018
    %1478 = vmatpush1.bf16.msra.mxu0 %v1017
    %1479 = vmatprep.subr.bf16.mxu0 %v1022
    %1480 = vmatpush1.bf16.msra.mxu0 %v1021
    %1481 = vmatprep.subr.bf16.mxu0 %v1026
    %1482 = vmatpush1.bf16.msra.mxu0 %v1025
    %1483 = vmatprep.subr.bf16.mxu0 %v1030
    %1484 = vmatpush1.bf16.msra.mxu0 %v1029
    %1485 = vmatprep.subr.bf16.mxu0 %v1034
    %1486 = vmatpush1.bf16.msra.mxu0 %v1033
    %1487 = vmatprep.mubr.bf16.mxu0 %v324
    %1488 = vmatmul.mubr.bf16.gmra.mrb[0].mxu0 %v323
    %v1489 = vpop.f32.mrb[0].mxu0
    %v1490 = vadd.f32 %v1449, %v1489
    %v1491 = vpop.f32.mrb[0].mxu0
    %v1492 = vadd.f32 %v1451, %v1491
    %v1493 = vpop.f32.mrb[0].mxu0
    %v1494 = vpop.f32.mrb[0].mxu0
    %1495 = vdwg.mxu0
    %1496 = vmatprep.subr.bf16.mxu0 %v1038
    %1497 = vmatpush1.bf16.msra.mxu0 %v1037
    %1498 = vmatprep.subr.bf16.mxu0 %v1042
    %1499 = vmatpush1.bf16.msra.mxu0 %v1041
    %1500 = vmatprep.subr.bf16.mxu0 %v1046
    %1501 = vmatpush1.bf16.msra.mxu0 %v1045
    %1502 = vmatprep.subr.bf16.mxu0 %v1050
    %1503 = vmatpush1.bf16.msra.mxu0 %v1049
    %1504 = vmatprep.subr.bf16.mxu0 %v1054
    %1505 = vmatpush1.bf16.msra.mxu0 %v1053
    %1506 = vmatprep.subr.bf16.mxu0 %v1058
    %1507 = vmatpush1.bf16.msra.mxu0 %v1057
    %1508 = vmatprep.subr.bf16.mxu0 %v1062
    %1509 = vmatpush1.bf16.msra.mxu0 %v1061
    %1510 = vmatprep.subr.bf16.mxu0 %v1066
    %1511 = vmatpush1.bf16.msra.mxu0 %v1065
    %1512 = vmatprep.subr.bf16.mxu0 %v1070
    %1513 = vmatpush1.bf16.msra.mxu0 %v1069
    %1514 = vmatprep.subr.bf16.mxu0 %v1074
    %1515 = vmatpush1.bf16.msra.mxu0 %v1073
    %1516 = vmatprep.subr.bf16.mxu0 %v1078
    %1517 = vmatpush1.bf16.msra.mxu0 %v1077
    %1518 = vmatprep.subr.bf16.mxu0 %v1082
    %1519 = vmatpush1.bf16.msra.mxu0 %v1081
    %1520 = vmatprep.subr.bf16.mxu0 %v1086
    %1521 = vmatpush1.bf16.msra.mxu0 %v1085
    %1522 = vmatprep.subr.bf16.mxu0 %v1090
    %1523 = vmatpush1.bf16.msra.mxu0 %v1089
    %1524 = vmatprep.subr.bf16.mxu0 %v1094
    %1525 = vmatpush1.bf16.msra.mxu0 %v1093
    %1526 = vmatprep.subr.bf16.mxu0 %v1098
    %1527 = vmatpush1.bf16.msra.mxu0 %v1097
    %1528 = vmatprep.mubr.bf16.mxu0 %v322
    %1529 = vmatmul.mubr.bf16.gmra.mrb[0].mxu0 %v308
    %v1530 = vpop.f32.mrb[0].mxu0
    %v1531 = vadd.f32 %v1490, %v1530
    %v1532 = vpop.f32.mrb[0].mxu0
    %v1533 = vadd.f32 %v1492, %v1532
    %v1534 = vpop.f32.mrb[0].mxu0
    %v1535 = vpop.f32.mrb[0].mxu0
    %1536 = vdwg.mxu0
    %v1537 = vmax.f32 %v1408, 0.0
    %v1538 = vmax.f32 %v1410, 0.0
    %v1539 = vmax.f32 %v1531, 0.0
    %v1540 = vmax.f32 %v1533, 0.0
    %v1541 = vpack.c.bf16 %v1537, %v1537
    %v1542 = vpack.c.bf16 %v1538, %v1538
    %v1543 = vpack.c.bf16 %v1539, %v1539
    %v1544 = vpack.c.bf16 %v1540, %v1540
    %v1545 = vld [vmem:[#allocation8] sm:$0xf]
    %v1546 = vld [vmem:[#allocation8 + $0x4] sm:$0xf]
    %v1547 = vld [vmem:[#allocation8 + $0x8] sm:$0xf]
    %v1548 = vld [vmem:[#allocation8 + $0xc] sm:$0xf]
    %v1549 = vld [vmem:[#allocation8 + $0x10] sm:$0xf]
    %v1550 = vld [vmem:[#allocation8 + $0x14] sm:$0xf]
    %v1551 = vld [vmem:[#allocation8 + $0x18] sm:$0xf]
    %v1552 = vld [vmem:[#allocation8 + $0x1c] sm:$0xf]
    %v1553 = vld [vmem:[#allocation8 + $0x20] sm:$0xf]
    %v1554 = vld [vmem:[#allocation8 + $0x24] sm:$0xf]
    %v1555 = vld [vmem:[#allocation8 + $0x28] sm:$0xf]
    %v1556 = vld [vmem:[#allocation8 + $0x2c] sm:$0xf]
    %v1557 = vld [vmem:[#allocation8 + $0x30] sm:$0xf]
    %v1558 = vld [vmem:[#allocation8 + $0x34] sm:$0xf]
    %v1559 = vld [vmem:[#allocation8 + $0x38] sm:$0xf]
    %v1560 = vld [vmem:[#allocation8 + $0x3c] sm:$0xf]
    %v1561 = vld [vmem:[#allocation8 + $0x40] sm:$0xf]
    %v1562 = vld [vmem:[#allocation8 + $0x44] sm:$0xf]
    %v1563 = vld [vmem:[#allocation8 + $0x48] sm:$0xf]
    %v1564 = vld [vmem:[#allocation8 + $0x4c] sm:$0xf]
    %v1565 = vld [vmem:[#allocation8 + $0x50] sm:$0xf]
    %v1566 = vld [vmem:[#allocation8 + $0x54] sm:$0xf]
    %v1567 = vld [vmem:[#allocation8 + $0x58] sm:$0xf]
    %v1568 = vld [vmem:[#allocation8 + $0x5c] sm:$0xf]
    %v1569 = vld [vmem:[#allocation8 + $0x60] sm:$0xf]
    %v1570 = vld [vmem:[#allocation8 + $0x64] sm:$0xf]
    %v1571 = vld [vmem:[#allocation8 + $0x68] sm:$0xf]
    %v1572 = vld [vmem:[#allocation8 + $0x6c] sm:$0xf]
    %v1573 = vld [vmem:[#allocation8 + $0x70] sm:$0xf]
    %v1574 = vld [vmem:[#allocation8 + $0x74] sm:$0xf]
    %v1575 = vld [vmem:[#allocation8 + $0x78] sm:$0xf]
    %v1576 = vld [vmem:[#allocation8 + $0x7c] sm:$0xf]
    %v1577 = vld [vmem:[#allocation8 + $0x80] sm:$0xf]
    %v1578 = vld [vmem:[#allocation8 + $0x84] sm:$0xf]
    %v1579 = vld [vmem:[#allocation8 + $0x88] sm:$0xf]
    %v1580 = vld [vmem:[#allocation8 + $0x8c] sm:$0xf]
    %v1581 = vld [vmem:[#allocation8 + $0x90] sm:$0xf]
    %v1582 = vld [vmem:[#allocation8 + $0x94] sm:$0xf]
    %v1583 = vld [vmem:[#allocation8 + $0x98] sm:$0xf]
    %v1584 = vld [vmem:[#allocation8 + $0x9c] sm:$0xf]
    %v1585 = vld [vmem:[#allocation8 + $0xa0] sm:$0xf]
    %v1586 = vld [vmem:[#allocation8 + $0xa4] sm:$0xf]
    %v1587 = vld [vmem:[#allocation8 + $0xa8] sm:$0xf]
    %v1588 = vld [vmem:[#allocation8 + $0xac] sm:$0xf]
    %v1589 = vld [vmem:[#allocation8 + $0xb0] sm:$0xf]
    %v1590 = vld [vmem:[#allocation8 + $0xb4] sm:$0xf]
    %v1591 = vld [vmem:[#allocation8 + $0xb8] sm:$0xf]
    %v1592 = vld [vmem:[#allocation8 + $0xbc] sm:$0xf]
    %v1593 = vld [vmem:[#allocation8 + $0xc0] sm:$0xf]
    %v1594 = vld [vmem:[#allocation8 + $0xc4] sm:$0xf]
    %v1595 = vld [vmem:[#allocation8 + $0xc8] sm:$0xf]
    %v1596 = vld [vmem:[#allocation8 + $0xcc] sm:$0xf]
    %v1597 = vld [vmem:[#allocation8 + $0xd0] sm:$0xf]
    %v1598 = vld [vmem:[#allocation8 + $0xd4] sm:$0xf]
    %v1599 = vld [vmem:[#allocation8 + $0xd8] sm:$0xf]
    %v1600 = vld [vmem:[#allocation8 + $0xdc] sm:$0xf]
    %v1601 = vld [vmem:[#allocation8 + $0xe0] sm:$0xf]
    %v1602 = vld [vmem:[#allocation8 + $0xe4] sm:$0xf]
    %v1603 = vld [vmem:[#allocation8 + $0xe8] sm:$0xf]
    %v1604 = vld [vmem:[#allocation8 + $0xec] sm:$0xf]
    %v1605 = vld [vmem:[#allocation8 + $0xf0] sm:$0xf]
    %v1606 = vld [vmem:[#allocation8 + $0xf4] sm:$0xf]
    %v1607 = vld [vmem:[#allocation8 + $0xf8] sm:$0xf]
    %v1608 = vld [vmem:[#allocation8 + $0xfc] sm:$0xf]
    %s1609 = sld [smem:[#allocation2]]
    %v1610 = vstv %s1609
    %v1675 = vunpack.c.l.b16 %v1545
    %v1676 = vunpack.c.l.b16 %v1546
    %v1677 = vunpack.c.l.b16 %v1547
    %v1678 = vunpack.c.l.b16 %v1548
    %v1679 = vunpack.c.l.b16 %v1549
    %v1680 = vunpack.c.l.b16 %v1550
    %v1681 = vunpack.c.l.b16 %v1551
    %v1682 = vunpack.c.l.b16 %v1552
    %v1683 = vunpack.c.l.b16 %v1553
    %v1684 = vunpack.c.l.b16 %v1554
    %v1685 = vunpack.c.l.b16 %v1555
    %v1686 = vunpack.c.l.b16 %v1556
    %v1687 = vunpack.c.l.b16 %v1557
    %v1688 = vunpack.c.l.b16 %v1558
    %v1689 = vunpack.c.l.b16 %v1559
    %v1690 = vunpack.c.l.b16 %v1560
    %v1691 = vunpack.c.l.b16 %v1561
    %v1692 = vunpack.c.l.b16 %v1562
    %v1693 = vunpack.c.l.b16 %v1563
    %v1694 = vunpack.c.l.b16 %v1564
    %v1695 = vunpack.c.l.b16 %v1565
    %v1696 = vunpack.c.l.b16 %v1566
    %v1697 = vunpack.c.l.b16 %v1567
    %v1698 = vunpack.c.l.b16 %v1568
    %v1699 = vunpack.c.l.b16 %v1569
    %v1700 = vunpack.c.l.b16 %v1570
    %v1701 = vunpack.c.l.b16 %v1571
    %v1702 = vunpack.c.l.b16 %v1572
    %v1703 = vunpack.c.l.b16 %v1573
    %v1704 = vunpack.c.l.b16 %v1574
    %v1705 = vunpack.c.l.b16 %v1575
    %v1706 = vunpack.c.l.b16 %v1576
    %v1707 = vunpack.c.l.b16 %v1577
    %v1708 = vunpack.c.l.b16 %v1578
    %v1709 = vunpack.c.l.b16 %v1579
    %v1710 = vunpack.c.l.b16 %v1580
    %v1711 = vunpack.c.l.b16 %v1581
    %v1712 = vunpack.c.l.b16 %v1582
    %v1713 = vunpack.c.l.b16 %v1583
    %v1714 = vunpack.c.l.b16 %v1584
    %v1715 = vunpack.c.l.b16 %v1585
    %v1716 = vunpack.c.l.b16 %v1586
    %v1717 = vunpack.c.l.b16 %v1587
    %v1718 = vunpack.c.l.b16 %v1588
    %v1719 = vunpack.c.l.b16 %v1589
    %v1720 = vunpack.c.l.b16 %v1590
    %v1721 = vunpack.c.l.b16 %v1591
    %v1722 = vunpack.c.l.b16 %v1592
    %v1723 = vunpack.c.l.b16 %v1593
    %v1724 = vunpack.c.l.b16 %v1594
    %v1725 = vunpack.c.l.b16 %v1595
    %v1726 = vunpack.c.l.b16 %v1596
    %v1727 = vunpack.c.l.b16 %v1597
    %v1728 = vunpack.c.l.b16 %v1598
    %v1729 = vunpack.c.l.b16 %v1599
    %v1730 = vunpack.c.l.b16 %v1600
    %v1731 = vunpack.c.l.b16 %v1601
    %v1732 = vunpack.c.l.b16 %v1602
    %v1733 = vunpack.c.l.b16 %v1603
    %v1734 = vunpack.c.l.b16 %v1604
    %v1735 = vunpack.c.l.b16 %v1605
    %v1736 = vunpack.c.l.b16 %v1606
    %v1737 = vunpack.c.l.b16 %v1607
    %v1738 = vunpack.c.l.b16 %v1608
    %v1739 = vpack.c.b16 %v1676, %v1675
    %v1740 = vpack.c.b16 %v1678, %v1677
    %v1741 = vpack.c.b16 %v1680, %v1679
    %v1742 = vpack.c.b16 %v1682, %v1681
    %v1743 = vpack.c.b16 %v1684, %v1683
    %v1744 = vpack.c.b16 %v1686, %v1685
    %v1745 = vpack.c.b16 %v1688, %v1687
    %v1746 = vpack.c.b16 %v1690, %v1689
    %v1747 = vpack.c.b16 %v1692, %v1691
    %v1748 = vpack.c.b16 %v1694, %v1693
    %v1749 = vpack.c.b16 %v1696, %v1695
    %v1750 = vpack.c.b16 %v1698, %v1697
    %v1751 = vpack.c.b16 %v1700, %v1699
    %v1752 = vpack.c.b16 %v1702, %v1701
    %v1753 = vpack.c.b16 %v1704, %v1703
    %v1754 = vpack.c.b16 %v1706, %v1705
    %v1755 = vpack.c.b16 %v1708, %v1707
    %v1756 = vpack.c.b16 %v1710, %v1709
    %v1757 = vpack.c.b16 %v1712, %v1711
    %v1758 = vpack.c.b16 %v1714, %v1713
    %v1759 = vpack.c.b16 %v1716, %v1715
    %v1760 = vpack.c.b16 %v1718, %v1717
    %v1761 = vpack.c.b16 %v1720, %v1719
    %v1762 = vpack.c.b16 %v1722, %v1721
    %v1763 = vpack.c.b16 %v1724, %v1723
    %v1764 = vpack.c.b16 %v1726, %v1725
    %v1765 = vpack.c.b16 %v1728, %v1727
    %v1766 = vpack.c.b16 %v1730, %v1729
    %v1767 = vpack.c.b16 %v1732, %v1731
    %v1768 = vpack.c.b16 %v1734, %v1733
    %v1769 = vpack.c.b16 %v1736, %v1735
    %v1770 = vpack.c.b16 %v1738, %v1737
    %1803 = vmatprep.subr.bf16.mxu0 0
    %1804 = vmatpush1.bf16.msra.mxu0 %v1739
    %1805 = vmatprep.subr.bf16.mxu0 0
    %1806 = vmatpush1.bf16.msra.mxu0 %v1740
    %1807 = vmatprep.subr.bf16.mxu0 0
    %1808 = vmatpush1.bf16.msra.mxu0 %v1741
    %1809 = vmatprep.subr.bf16.mxu0 0
    %1810 = vmatpush1.bf16.msra.mxu0 %v1742
    %1811 = vmatprep.subr.bf16.mxu0 0
    %1812 = vmatpush1.bf16.msra.mxu0 %v1743
    %1813 = vmatprep.subr.bf16.mxu0 0
    %1814 = vmatpush1.bf16.msra.mxu0 %v1744
    %1815 = vmatprep.subr.bf16.mxu0 0
    %1816 = vmatpush1.bf16.msra.mxu0 %v1745
    %1817 = vmatprep.subr.bf16.mxu0 0
    %1818 = vmatpush1.bf16.msra.mxu0 %v1746
    %1819 = vmatprep.subr.bf16.mxu0 0
    %1820 = vmatpush1.bf16.msra.mxu0 %v1747
    %1821 = vmatprep.subr.bf16.mxu0 0
    %1822 = vmatpush1.bf16.msra.mxu0 %v1748
    %1823 = vmatprep.subr.bf16.mxu0 0
    %1824 = vmatpush1.bf16.msra.mxu0 %v1749
    %1825 = vmatprep.subr.bf16.mxu0 0
    %1826 = vmatpush1.bf16.msra.mxu0 %v1750
    %1827 = vmatprep.subr.bf16.mxu0 0
    %1828 = vmatpush1.bf16.msra.mxu0 %v1751
    %1829 = vmatprep.subr.bf16.mxu0 0
    %1830 = vmatpush1.bf16.msra.mxu0 %v1752
    %1831 = vmatprep.subr.bf16.mxu0 0
    %1832 = vmatpush1.bf16.msra.mxu0 %v1753
    %1833 = vmatprep.subr.bf16.mxu0 0
    %1834 = vmatpush1.bf16.msra.mxu0 %v1754
    %1835 = vmatprep.mubr.bf16.mxu0 %v1542
    %1836 = vmatmul.mubr.bf16.gmra.mrb[0].mxu0 %v1541
    %v1837 = vpop.f32.mrb[0].mxu0
    %v1838 = vadd.f32 %v1610, %v1837
    %v1839 = vpop.f32.mrb[0].mxu0
    %v1840 = vpop.f32.mrb[0].mxu0
    %v1841 = vpop.f32.mrb[0].mxu0
    %1842 = vdwg.mxu0
    %1843 = vmatprep.subr.bf16.mxu0 0
    %1844 = vmatpush1.bf16.msra.mxu0 %v1755
    %1845 = vmatprep.subr.bf16.mxu0 0
    %1846 = vmatpush1.bf16.msra.mxu0 %v1756
    %1847 = vmatprep.subr.bf16.mxu0 0
    %1848 = vmatpush1.bf16.msra.mxu0 %v1757
    %1849 = vmatprep.subr.bf16.mxu0 0
    %1850 = vmatpush1.bf16.msra.mxu0 %v1758
    %1851 = vmatprep.subr.bf16.mxu0 0
    %1852 = vmatpush1.bf16.msra.mxu0 %v1759
    %1853 = vmatprep.subr.bf16.mxu0 0
    %1854 = vmatpush1.bf16.msra.mxu0 %v1760
    %1855 = vmatprep.subr.bf16.mxu0 0
    %1856 = vmatpush1.bf16.msra.mxu0 %v1761
    %1857 = vmatprep.subr.bf16.mxu0 0
    %1858 = vmatpush1.bf16.msra.mxu0 %v1762
    %1859 = vmatprep.subr.bf16.mxu0 0
    %1860 = vmatpush1.bf16.msra.mxu0 %v1763
    %1861 = vmatprep.subr.bf16.mxu0 0
    %1862 = vmatpush1.bf16.msra.mxu0 %v1764
    %1863 = vmatprep.subr.bf16.mxu0 0
    %1864 = vmatpush1.bf16.msra.mxu0 %v1765
    %1865 = vmatprep.subr.bf16.mxu0 0
    %1866 = vmatpush1.bf16.msra.mxu0 %v1766
    %1867 = vmatprep.subr.bf16.mxu0 0
    %1868 = vmatpush1.bf16.msra.mxu0 %v1767
    %1869 = vmatprep.subr.bf16.mxu0 0
    %1870 = vmatpush1.bf16.msra.mxu0 %v1768
    %1871 = vmatprep.subr.bf16.mxu0 0
    %1872 = vmatpush1.bf16.msra.mxu0 %v1769
    %1873 = vmatprep.subr.bf16.mxu0 0
    %1874 = vmatpush1.bf16.msra.mxu0 %v1770
    %1875 = vmatprep.mubr.bf16.mxu0 %v1544
    %1876 = vmatmul.mubr.bf16.gmra.mrb[0].mxu0 %v1543
    %v1877 = vpop.f32.mrb[0].mxu0
    %v1878 = vadd.f32 %v1838, %v1877
    %v1879 = vpop.f32.mrb[0].mxu0
    %v1880 = vpop.f32.mrb[0].mxu0
    %v1881 = vpop.f32.mrb[0].mxu0
    %1882 = vdwg.mxu0
    %v1883 = vxor.u32 %v1878, 2147483648
    %v1884 = vmul.f32 %v1883, 1.442695
    %v1885 = vpow.pop %v1884
    %v1886 = vadd.f32 %v1885, 1.0
    %v1887 = vrcp.pop %v1886
    %v1888 = vmul.f32 1.0, %v1887
    %v1889 = vpack.c.bf16 %v1888, %v1888
    %1890 = vst [vmem:[#allocation9] sm:$0x1] %v1889
    // Predicated region
    $region34: #{tpu_custom_call.1} parent=1 // pred_check
      _
    $region35: #{tpu_custom_call.1} parent=1 // pred_check_branch
      %1892 = sbr.rel (0) target = $region37
    $region36: #{tpu_custom_call.1} parent=1 // pred_region
      %s1894 = ssub.s32 16, 16
      %1895 = vsyncadd [#allocation5], %s1894
      %s1897 = sshll.u32 [#allocation9], 4
      %s1898 = int_to_ptr.vmem [resolvable:$true] %s1897
      %1900 = dma.vmem_to_hbm [thread:$0]  %s1898, 16, %s5, [#allocation5]
    $region37: #{tpu_custom_call.1} parent=1 // pred_fallthru
      _
    // Predicated region
    $region38: #{tpu_custom_call.1} parent=1 // pred_check
      _
    $region39: #{tpu_custom_call.1} parent=1 // pred_check_branch
      %1902 = sbr.rel (0) target = $region41
    $region40: #{tpu_custom_call.1} parent=1 // pred_region
      %1903 = dma.done [#allocation5], 16
    $region41: #{tpu_custom_call.1} parent=1 // pred_fallthru
      _
    %1904 = vsyncpa [#allocation4], 1
    %1905 = vsyncpa [#allocation7], 1
    %1906 = vsyncpa [#allocation5], 1

</llo_original>
